<compile_context>
chip_gen: v5e
topology: v5e:2x2
jax: 0.10.0
libtpu: 0.0.40
codegen_flags: <defaults>
</compile_context>

<pallas_src>
import functools

import jax
import jax.numpy as jnp
from jax.experimental import pallas as pl
from jax.experimental.pallas import tpu as pltpu

BN_EPS = 1e-5


def _round_up(v, m):
    return ((v + m - 1) // m) * m


# ---------------------------------------------------------------------------
# Pass A: the two 1x1 convs + bias, emitting only per-tile per-channel
#         sum / sum-of-squares (BN1 / BN2 batch statistics). No big outputs.
# ---------------------------------------------------------------------------
def _conv_stats_kernel(x_ref, a_ref, wx_ref, bx_ref, wa_ref, ba_ref,
                       sx_ref, sxx_ref, sa_ref, saa_ref):
    x = x_ref[0]                                   # (cin, tile_hw)
    a = a_ref[0]
    yx = jnp.dot(wx_ref[...], x, preferred_element_type=jnp.float32) + bx_ref[...]
    ya = jnp.dot(wa_ref[...], a, preferred_element_type=jnp.float32) + ba_ref[...]
    cout = yx.shape[0]
    # Lane (XLU) reductions -> tiny (cout, 1) per-tile partial statistics, written
    # to disjoint blocks (no cross-grid-step state => "parallel" semantics).
    sx_ref[...] = jnp.sum(yx, axis=1, keepdims=True).reshape(1, 1, cout, 1)
    sxx_ref[...] = jnp.sum(yx * yx, axis=1, keepdims=True).reshape(1, 1, cout, 1)
    sa_ref[...] = jnp.sum(ya, axis=1, keepdims=True).reshape(1, 1, cout, 1)
    saa_ref[...] = jnp.sum(ya * ya, axis=1, keepdims=True).reshape(1, 1, cout, 1)


# ---------------------------------------------------------------------------
# Pass B: recompute the two 1x1 convs with BN1/BN2 folded into the weights,
#         ReLU, then the Cout->1 conv (psi) on the MXU, plus psi's per-tile stats.
# ---------------------------------------------------------------------------
def _psi_stats_kernel(x_ref, a_ref, wxf_ref, bxf_ref, waf_ref, baf_ref,
                      wo8_ref, bo_ref, psi_ref, sp_ref, spp_ref):
    x = x_ref[0]                                   # (cin, tile_hw)
    a = a_ref[0]
    yx = jnp.dot(wxf_ref[...], x, preferred_element_type=jnp.float32) + bxf_ref[...]
    ya = jnp.dot(waf_ref[...], a, preferred_element_type=jnp.float32) + baf_ref[...]
    r = jnp.maximum(yx + ya, 0.0)                  # (cout, tile_hw)
    # Conv2d(Cout, 1, 1): ride the idle MXU. wo8 is (8, cout) with wo in row 0 and
    # zeros elsewhere, keeping the matmul in a well-supported (8,K)@(K,N) shape.
    psi8 = jnp.dot(wo8_ref[...], r, preferred_element_type=jnp.float32)
    psi = psi8[0:1, :] + bo_ref[...]               # (1, tile_hw)
    psi_ref[0] = psi
    sp_ref[...] = jnp.sum(psi, axis=1, keepdims=True).reshape(1, 1, 1, 1)
    spp_ref[...] = jnp.sum(psi * psi, axis=1, keepdims=True).reshape(1, 1, 1, 1)


# ---------------------------------------------------------------------------
# Pass C: out = attachment * sigmoid(BN3(psi)); BN3 is a global scalar affine.
# ---------------------------------------------------------------------------
def _apply_gate_kernel(a_ref, psi_ref, sco_ref, sho_ref, out_ref):
    z = psi_ref[0] * sco_ref[...] + sho_ref[...]   # (1, tile_hw)
    gate = jax.nn.sigmoid(z)                       # exp rides the EUP slot
    out_ref[0] = a_ref[0] * gate                   # (cin, tile_hw) * (1, tile_hw)


def _bn_affine(s, ss, count, gamma, beta):
    """Fold training-mode BatchNorm into per-channel scale/shift (tiny O(C) glue)."""
    mean = s / count
    var = jnp.maximum(ss / count - jnp.square(mean), 0.0)
    scale = gamma * jax.lax.rsqrt(var + BN_EPS)
    shift = beta - mean * scale
    return scale, shift


def attention_block_forward(x, attachment, params, *, tile_hw=8192):
    """Forward pass matching attention_block.forward (NCHW in, NCHW out)."""
    n, cin, h, w = x.shape
    cout = params["wx"].shape[0]
    hw = h * w

    tile_hw = max(128, min(int(tile_hw), _round_up(hw, 128)))
    tile_hw = _round_up(tile_hw, 128)
    num_j = pl.cdiv(hw, tile_hw)
    hw_pad = num_j * tile_hw
    pad = hw_pad - hw
    count = n * hw                                  # BN batch-stat element count

    # NCHW -> (N, C, H*W): a free reshape (no transpose / extra HBM traffic).
    x3 = x.reshape(n, cin, hw).astype(jnp.float32)
    a3 = attachment.reshape(n, cin, hw).astype(jnp.float32)
    if pad:
        x3 = jnp.pad(x3, ((0, 0), (0, 0), (0, pad)))
        a3 = jnp.pad(a3, ((0, 0), (0, 0), (0, pad)))

    wx = params["wx"].reshape(cout, cin).astype(jnp.float32)
    bx = params["bx"].reshape(cout, 1).astype(jnp.float32)
    wa = params["wa"].reshape(cout, cin).astype(jnp.float32)
    ba = params["ba"].reshape(cout, 1).astype(jnp.float32)
    wo = params["wo"].reshape(1, cout).astype(jnp.float32)   # (1,Cout,1,1) -> (1,Cout)
    bo = params["bo"].reshape(1, 1).astype(jnp.float32)
    wo8 = jnp.pad(wo, ((0, 7), (0, 0)))                       # (8, cout), rows 1..7 = 0

    cp = pltpu.CompilerParams(
        dimension_semantics=("parallel", "parallel"),         # megacore on v7x
        vmem_limit_bytes=32 * 1024 * 1024)                    # safe for v7x's 64 MiB

    big_in = pl.BlockSpec((1, cin, tile_hw), lambda i, j: (i, 0, j))
    psi_spec = pl.BlockSpec((1, 1, tile_hw), lambda i, j: (i, 0, j))
    w_spec = pl.BlockSpec((cout, cin), lambda i, j: (0, 0))
    b_spec = pl.BlockSpec((cout, 1), lambda i, j: (0, 0))
    stat_spec = pl.BlockSpec((1, 1, cout, 1), lambda i, j: (i, j, 0, 0))
    stat1_spec = pl.BlockSpec((1, 1, 1, 1), lambda i, j: (i, j, 0, 0))
    scal_spec = pl.BlockSpec((1, 1), lambda i, j: (0, 0))

    stat_shape = jax.ShapeDtypeStruct((n, num_j, cout, 1), jnp.float32)
    stat1_shape = jax.ShapeDtypeStruct((n, num_j, 1, 1), jnp.float32)

    # ------------------------------ Pass A ---------------------------------
    sx, sxx, sa, saa = pl.pallas_call(
        _conv_stats_kernel,
        grid=(n, num_j),
        in_specs=[big_in, big_in, w_spec, b_spec, w_spec, b_spec],
        out_specs=[stat_spec] * 4,
        out_shape=[stat_shape] * 4,
        compiler_params=cp,
    )(x3, a3, wx, bx, wa, ba)

    # Reduce per-tile partial sums host-side (tiny O(n*num_j*cout) work); this also
    # mitigates E[x^2]-E[x]^2 cancellation vs. one long running sum.
    sx = jnp.sum(sx, axis=(0, 1))
    sxx = jnp.sum(sxx, axis=(0, 1))
    sa = jnp.sum(sa, axis=(0, 1))
    saa = jnp.sum(saa, axis=(0, 1))
    if pad:
        # Padded columns of the conv outputs equal the bias exactly; correct stats.
        pc = n * pad
        sx, sxx = sx - pc * bx, sxx - pc * jnp.square(bx)
        sa, saa = sa - pc * ba, saa - pc * jnp.square(ba)

    scx, shx = _bn_affine(sx, sxx, count,
                          params["gamma_x"].reshape(cout, 1).astype(jnp.float32),
                          params["beta_x"].reshape(cout, 1).astype(jnp.float32))
    sca, sha = _bn_affine(sa, saa, count,
                          params["gamma_a"].reshape(cout, 1).astype(jnp.float32),
                          params["beta_a"].reshape(cout, 1).astype(jnp.float32))

    # Fold BN1/BN2 into the 1x1 conv weights so yx/ya never touch HBM.
    wxf, bxf = scx * wx, scx * bx + shx
    waf, baf = sca * wa, sca * ba + sha

    # ------------------------------ Pass B ---------------------------------
    psi3, sp, spp = pl.pallas_call(
        _psi_stats_kernel,
        grid=(n, num_j),
        in_specs=[big_in, big_in, w_spec, b_spec, w_spec, b_spec,
                  pl.BlockSpec((8, cout), lambda i, j: (0, 0)),
                  scal_spec],
        out_specs=[psi_spec, stat1_spec, stat1_spec],
        out_shape=[jax.ShapeDtypeStruct((n, 1, hw_pad), jnp.float32),
                   stat1_shape, stat1_shape],
        compiler_params=cp,
    )(x3, a3, wxf, bxf, waf, baf, wo8, bo)

    sp = jnp.sum(sp, axis=(0, 1))
    spp = jnp.sum(spp, axis=(0, 1))
    if pad:
        # Padded columns of psi are an exactly computable constant.
        r_pad = jnp.maximum(bxf + baf, 0.0)                    # (cout, 1)
        psi_pad = wo @ r_pad + bo                              # (1, 1)
        pc = n * pad
        sp = sp - pc * psi_pad
        spp = spp - pc * jnp.square(psi_pad)

    sco, sho = _bn_affine(sp, spp, count,
                          params["gamma_o"].reshape(1, 1).astype(jnp.float32),
                          params["beta_o"].reshape(1, 1).astype(jnp.float32))

    # ------------------------------ Pass C ---------------------------------
    out3 = pl.pallas_call(
        _apply_gate_kernel,
        grid=(n, num_j),
        in_specs=[big_in, psi_spec, scal_spec, scal_spec],
        out_specs=pl.BlockSpec((1, cin, tile_hw), lambda i, j: (i, 0, j)),
        out_shape=jax.ShapeDtypeStruct((n, cin, hw_pad), jnp.float32),
        compiler_params=cp,
    )(a3, psi3, sco, sho)

    if pad:
        out3 = out3[:, :, :hw]
    return out3.reshape(n, cin, h, w)


# ---------------------------------------------------------------------------
# Pure-JAX reference (for correctness check only).
# ---------------------------------------------------------------------------
def reference_forward(x, attachment, params):
    def conv1x1(inp, w, b):
        y = jax.lax.conv_general_dilated(
            inp, w, window_strides=(1, 1), padding="VALID",
            dimension_numbers=("NCHW", "OIHW", "NCHW"))
        return y + b.reshape(1, -1, 1, 1)

    def bn(y, gamma, beta):
        mean = jnp.mean(y, axis=(0, 2, 3), keepdims=True)
        var = jnp.mean(jnp.square(y - mean), axis=(0, 2, 3), keepdims=True)
        yh = (y - mean) * jax.lax.rsqrt(var + BN_EPS)
        return yh * gamma.reshape(1, -1, 1, 1) + beta.reshape(1, -1, 1, 1)

    xr = bn(conv1x1(x, params["wx"], params["bx"]), params["gamma_x"], params["beta_x"])
    ar = bn(conv1x1(attachment, params["wa"], params["ba"]), params["gamma_a"], params["beta_a"])
    r = jnp.maximum(xr + ar, 0.0)
    psi = bn(conv1x1(r, params["wo"], params["bo"]), params["gamma_o"], params["beta_o"])
    return attachment * jax.nn.sigmoid(psi)


if __name__ == "__main__":
    N, CIN, COUT, H, W = 2, 4, 8, 16, 16

    key = jax.random.PRNGKey(0)
    ks = jax.random.split(key, 8)

    def conv_init(kw, kb, cout, cin):
        bound = 1.0 / (cin ** 0.5)  # kernel_size=1 -> fan_in = cin
        wgt = jax.random.uniform(kw, (cout, cin, 1, 1), jnp.float32, -bound, bound)
        bia = jax.random.uniform(kb, (cout,), jnp.float32, -bound, bound)
        return wgt, bia

    wx_, bx_ = conv_init(ks[0], ks[1], COUT, CIN)
    wa_, ba_ = conv_init(ks[2], ks[3], COUT, CIN)
    wo_, bo_ = conv_init(ks[4], ks[5], 1, COUT)

    params = dict(
        wx=wx_, bx=bx_,
        gamma_x=jnp.ones((COUT,), jnp.float32), beta_x=jnp.zeros((COUT,), jnp.float32),
        wa=wa_, ba=ba_,
        gamma_a=jnp.ones((COUT,), jnp.float32), beta_a=jnp.zeros((COUT,), jnp.float32),
        wo=wo_, bo=bo_,
        gamma_o=jnp.ones((1,), jnp.float32), beta_o=jnp.zeros((1,), jnp.float32),
    )

    x = jax.random.normal(ks[6], (N, CIN, H, W), jnp.float32)
    attachment = jax.random.normal(ks[7], (N, CIN, H, W), jnp.float32)

    # tile_hw=128 so the small test (H*W = 256) exercises a multi-tile grid and the
    # host-side partial-stat reduction; real sizes use the default (8192).
    fwd = jax.jit(functools.partial(attention_block_forward, tile_hw=128))
    out = jax.block_until_ready(fwd(x, attachment, params))

    ref = jax.block_until_ready(reference_forward(x, attachment, params))
    assert out.shape == (N, CIN, H, W)
    max_err = float(jnp.max(jnp.abs(out - ref)))
    assert jnp.allclose(out, ref, atol=1e-4, rtol=1e-4), max_err

    print("KERNEL_OK")
</pallas_src>

<mosaic_0001>
module attributes {stable_mosaic.version = 11 : i64} {
  func.func @_conv_stats_kernel(%arg0: i32, %arg1: i32, %arg2: memref<1x4x128xf32, #tpu.memory_space<vmem>>, %arg3: memref<1x4x128xf32, #tpu.memory_space<vmem>>, %arg4: memref<8x4xf32, #tpu.memory_space<vmem>>, %arg5: memref<8x1xf32, #tpu.memory_space<vmem>>, %arg6: memref<8x4xf32, #tpu.memory_space<vmem>>, %arg7: memref<8x1xf32, #tpu.memory_space<vmem>>, %arg8: memref<1x1x8x1xf32, #tpu.memory_space<vmem>>, %arg9: memref<1x1x8x1xf32, #tpu.memory_space<vmem>>, %arg10: memref<1x1x8x1xf32, #tpu.memory_space<vmem>>, %arg11: memref<1x1x8x1xf32, #tpu.memory_space<vmem>>) attributes {dimension_semantics = [#tpu.dimension_semantics<parallel>, #tpu.dimension_semantics<parallel>], iteration_bounds = array<i64: 2, 2>, scalar_prefetch = 0 : i64, scratch_operands = 0 : i64, tpu.core_type = #tpu.core_type<tc>, window_params = [{transform_indices = @transform_0, window_bounds = array<i64: 1, 4, 128>}, {transform_indices = @transform_1, window_bounds = array<i64: 1, 4, 128>}, {pipeline_mode = #tpu.pipeline_mode<synchronous>, transform_indices = @transform_2, window_bounds = array<i64: 8, 4>}, {pipeline_mode = #tpu.pipeline_mode<synchronous>, transform_indices = @transform_3, window_bounds = array<i64: 8, 1>}, {pipeline_mode = #tpu.pipeline_mode<synchronous>, transform_indices = @transform_4, window_bounds = array<i64: 8, 4>}, {pipeline_mode = #tpu.pipeline_mode<synchronous>, transform_indices = @transform_5, window_bounds = array<i64: 8, 1>}, {transform_indices = @transform_6, window_bounds = array<i64: 1, 1, 8, 1>}, {transform_indices = @transform_7, window_bounds = array<i64: 1, 1, 8, 1>}, {transform_indices = @transform_8, window_bounds = array<i64: 1, 1, 8, 1>}, {transform_indices = @transform_9, window_bounds = array<i64: 1, 1, 8, 1>}]} {
    %c0 = arith.constant 0 : index
    %c0_0 = arith.constant 0 : index
    %c0_1 = arith.constant 0 : index
    %0 = vector.load %arg2[%c0, %c0_0, %c0_1] : memref<1x4x128xf32, #tpu.memory_space<vmem>>, vector<1x4x128xf32>
    %1 = vector.shape_cast %0 : vector<1x4x128xf32> to vector<4x128xf32>
    %c0_2 = arith.constant 0 : index
    %c0_3 = arith.constant 0 : index
    %c0_4 = arith.constant 0 : index
    %2 = vector.load %arg3[%c0_2, %c0_3, %c0_4] : memref<1x4x128xf32, #tpu.memory_space<vmem>>, vector<1x4x128xf32>
    %3 = vector.shape_cast %2 : vector<1x4x128xf32> to vector<4x128xf32>
    %c0_5 = arith.constant 0 : index
    %c0_6 = arith.constant 0 : index
    %4 = vector.load %arg4[%c0_5, %c0_6] : memref<8x4xf32, #tpu.memory_space<vmem>>, vector<8x4xf32>
    %cst = arith.constant dense<0.000000e+00> : vector<8x128xf32>
    %5 = tpu.matmul %4, %1, %cst {dimension_numbers = #tpu.dot_dimension_numbers<[1], [0], [0], [1], [0, 0, 1, 1], [], []>} : vector<8x4xf32>, vector<4x128xf32>, vector<8x128xf32> -> vector<8x128xf32>
    %c0_7 = arith.constant 0 : index
    %c0_8 = arith.constant 0 : index
    %6 = vector.load %arg5[%c0_7, %c0_8] : memref<8x1xf32, #tpu.memory_space<vmem>>, vector<8x1xf32>
    %7 = vector.broadcast %6 : vector<8x1xf32> to vector<8x128xf32>
    %8 = arith.addf %5, %7 : vector<8x128xf32>
    %c0_9 = arith.constant 0 : index
    %c0_10 = arith.constant 0 : index
    %9 = vector.load %arg6[%c0_9, %c0_10] : memref<8x4xf32, #tpu.memory_space<vmem>>, vector<8x4xf32>
    %cst_11 = arith.constant dense<0.000000e+00> : vector<8x128xf32>
    %10 = tpu.matmul %9, %3, %cst_11 {dimension_numbers = #tpu.dot_dimension_numbers<[1], [0], [0], [1], [0, 0, 1, 1], [], []>} : vector<8x4xf32>, vector<4x128xf32>, vector<8x128xf32> -> vector<8x128xf32>
    %c0_12 = arith.constant 0 : index
    %c0_13 = arith.constant 0 : index
    %11 = vector.load %arg7[%c0_12, %c0_13] : memref<8x1xf32, #tpu.memory_space<vmem>>, vector<8x1xf32>
    %12 = vector.broadcast %11 : vector<8x1xf32> to vector<8x128xf32>
    %13 = arith.addf %10, %12 : vector<8x128xf32>
    %cst_14 = arith.constant dense<0.000000e+00> : vector<8xf32>
    %14 = vector.multi_reduction <add>, %8, %cst_14 [1] : vector<8x128xf32> to vector<8xf32>
    %15 = vector.shape_cast %14 : vector<8xf32> to vector<8x1xf32>
    %16 = vector.shape_cast %15 : vector<8x1xf32> to vector<1x1x8x1xf32>
    %c0_15 = arith.constant 0 : index
    %c0_16 = arith.constant 0 : index
    %c0_17 = arith.constant 0 : index
    %c0_18 = arith.constant 0 : index
    %17 = vector.load %arg8[%c0_15, %c0_16, %c0_17, %c0_18] : memref<1x1x8x1xf32, #tpu.memory_space<vmem>>, vector<1x1x8x1xf32>
    tpu.vector_store %arg8[%c0_15, %c0_16, %c0_17, %c0_18], %16 {strides = array<i32>} : memref<1x1x8x1xf32, #tpu.memory_space<vmem>>, vector<1x1x8x1xf32>,
    %18 = arith.mulf %8, %8 : vector<8x128xf32>
    %cst_19 = arith.constant dense<0.000000e+00> : vector<8xf32>
    %19 = vector.multi_reduction <add>, %18, %cst_19 [1] : vector<8x128xf32> to vector<8xf32>
    %20 = vector.shape_cast %19 : vector<8xf32> to vector<8x1xf32>
    %21 = vector.shape_cast %20 : vector<8x1xf32> to vector<1x1x8x1xf32>
    %c0_20 = arith.constant 0 : index
    %c0_21 = arith.constant 0 : index
    %c0_22 = arith.constant 0 : index
    %c0_23 = arith.constant 0 : index
    %22 = vector.load %arg9[%c0_20, %c0_21, %c0_22, %c0_23] : memref<1x1x8x1xf32, #tpu.memory_space<vmem>>, vector<1x1x8x1xf32>
    tpu.vector_store %arg9[%c0_20, %c0_21, %c0_22, %c0_23], %21 {strides = array<i32>} : memref<1x1x8x1xf32, #tpu.memory_space<vmem>>, vector<1x1x8x1xf32>,
    %cst_24 = arith.constant dense<0.000000e+00> : vector<8xf32>
    %23 = vector.multi_reduction <add>, %13, %cst_24 [1] : vector<8x128xf32> to vector<8xf32>
    %24 = vector.shape_cast %23 : vector<8xf32> to vector<8x1xf32>
    %25 = vector.shape_cast %24 : vector<8x1xf32> to vector<1x1x8x1xf32>
    %c0_25 = arith.constant 0 : index
    %c0_26 = arith.constant 0 : index
    %c0_27 = arith.constant 0 : index
    %c0_28 = arith.constant 0 : index
    %26 = vector.load %arg10[%c0_25, %c0_26, %c0_27, %c0_28] : memref<1x1x8x1xf32, #tpu.memory_space<vmem>>, vector<1x1x8x1xf32>
    tpu.vector_store %arg10[%c0_25, %c0_26, %c0_27, %c0_28], %25 {strides = array<i32>} : memref<1x1x8x1xf32, #tpu.memory_space<vmem>>, vector<1x1x8x1xf32>,
    %27 = arith.mulf %13, %13 : vector<8x128xf32>
    %cst_29 = arith.constant dense<0.000000e+00> : vector<8xf32>
    %28 = vector.multi_reduction <add>, %27, %cst_29 [1] : vector<8x128xf32> to vector<8xf32>
    %29 = vector.shape_cast %28 : vector<8xf32> to vector<8x1xf32>
    %30 = vector.shape_cast %29 : vector<8x1xf32> to vector<1x1x8x1xf32>
    %c0_30 = arith.constant 0 : index
    %c0_31 = arith.constant 0 : index
    %c0_32 = arith.constant 0 : index
    %c0_33 = arith.constant 0 : index
    %31 = vector.load %arg11[%c0_30, %c0_31, %c0_32, %c0_33] : memref<1x1x8x1xf32, #tpu.memory_space<vmem>>, vector<1x1x8x1xf32>
    tpu.vector_store %arg11[%c0_30, %c0_31, %c0_32, %c0_33], %30 {strides = array<i32>} : memref<1x1x8x1xf32, #tpu.memory_space<vmem>>, vector<1x1x8x1xf32>,
    return
  }
  func.func @transform_0(%arg0: i32, %arg1: i32) -> (i32, i32, i32) {
    %c0_i32 = arith.constant 0 : i32
    %c0_i32_0 = arith.constant 0 : i32
    return %arg0, %c0_i32, %arg1 : i32, i32, i32
  }
  func.func @transform_1(%arg0: i32, %arg1: i32) -> (i32, i32, i32) {
    %c0_i32 = arith.constant 0 : i32
    %c0_i32_0 = arith.constant 0 : i32
    return %arg0, %c0_i32, %arg1 : i32, i32, i32
  }
  func.func @transform_2(%arg0: i32, %arg1: i32) -> (i32, i32) {
    %c0_i32 = arith.constant 0 : i32
    %c0_i32_0 = arith.constant 0 : i32
    %c0_i32_1 = arith.constant 0 : i32
    return %c0_i32, %c0_i32_0 : i32, i32
  }
  func.func @transform_3(%arg0: i32, %arg1: i32) -> (i32, i32) {
    %c0_i32 = arith.constant 0 : i32
    %c0_i32_0 = arith.constant 0 : i32
    %c0_i32_1 = arith.constant 0 : i32
    return %c0_i32, %c0_i32_0 : i32, i32
  }
  func.func @transform_4(%arg0: i32, %arg1: i32) -> (i32, i32) {
    %c0_i32 = arith.constant 0 : i32
    %c0_i32_0 = arith.constant 0 : i32
    %c0_i32_1 = arith.constant 0 : i32
    return %c0_i32, %c0_i32_0 : i32, i32
  }
  func.func @transform_5(%arg0: i32, %arg1: i32) -> (i32, i32) {
    %c0_i32 = arith.constant 0 : i32
    %c0_i32_0 = arith.constant 0 : i32
    %c0_i32_1 = arith.constant 0 : i32
    return %c0_i32, %c0_i32_0 : i32, i32
  }
  func.func @transform_6(%arg0: i32, %arg1: i32) -> (i32, i32, i32, i32) {
    %c0_i32 = arith.constant 0 : i32
    %c0_i32_0 = arith.constant 0 : i32
    %c0_i32_1 = arith.constant 0 : i32
    return %arg0, %arg1, %c0_i32, %c0_i32_0 : i32, i32, i32, i32
  }
  func.func @transform_7(%arg0: i32, %arg1: i32) -> (i32, i32, i32, i32) {
    %c0_i32 = arith.constant 0 : i32
    %c0_i32_0 = arith.constant 0 : i32
    %c0_i32_1 = arith.constant 0 : i32
    return %arg0, %arg1, %c0_i32, %c0_i32_0 : i32, i32, i32, i32
  }
  func.func @transform_8(%arg0: i32, %arg1: i32) -> (i32, i32, i32, i32) {
    %c0_i32 = arith.constant 0 : i32
    %c0_i32_0 = arith.constant 0 : i32
    %c0_i32_1 = arith.constant 0 : i32
    return %arg0, %arg1, %c0_i32, %c0_i32_0 : i32, i32, i32, i32
  }
  func.func @transform_9(%arg0: i32, %arg1: i32) -> (i32, i32, i32, i32) {
    %c0_i32 = arith.constant 0 : i32
    %c0_i32_0 = arith.constant 0 : i32
    %c0_i32_1 = arith.constant 0 : i32
    return %arg0, %arg1, %c0_i32, %c0_i32_0 : i32, i32, i32, i32
  }
}

module attributes {stable_mosaic.version = 11 : i64} {
  func.func @_psi_stats_kernel(%arg0: i32, %arg1: i32, %arg2: memref<1x4x128xf32, #tpu.memory_space<vmem>>, %arg3: memref<1x4x128xf32, #tpu.memory_space<vmem>>, %arg4: memref<8x4xf32, #tpu.memory_space<vmem>>, %arg5: memref<8x1xf32, #tpu.memory_space<vmem>>, %arg6: memref<8x4xf32, #tpu.memory_space<vmem>>, %arg7: memref<8x1xf32, #tpu.memory_space<vmem>>, %arg8: memref<8x8xf32, #tpu.memory_space<vmem>>, %arg9: memref<1x1xf32, #tpu.memory_space<vmem>>, %arg10: memref<1x1x128xf32, #tpu.memory_space<vmem>>, %arg11: memref<1x1x1x1xf32, #tpu.memory_space<vmem>>, %arg12: memref<1x1x1x1xf32, #tpu.memory_space<vmem>>) attributes {dimension_semantics = [#tpu.dimension_semantics<parallel>, #tpu.dimension_semantics<parallel>], iteration_bounds = array<i64: 2, 2>, scalar_prefetch = 0 : i64, scratch_operands = 0 : i64, tpu.core_type = #tpu.core_type<tc>, window_params = [{transform_indices = @transform_0, window_bounds = array<i64: 1, 4, 128>}, {transform_indices = @transform_1, window_bounds = array<i64: 1, 4, 128>}, {pipeline_mode = #tpu.pipeline_mode<synchronous>, transform_indices = @transform_2, window_bounds = array<i64: 8, 4>}, {pipeline_mode = #tpu.pipeline_mode<synchronous>, transform_indices = @transform_3, window_bounds = array<i64: 8, 1>}, {pipeline_mode = #tpu.pipeline_mode<synchronous>, transform_indices = @transform_4, window_bounds = array<i64: 8, 4>}, {pipeline_mode = #tpu.pipeline_mode<synchronous>, transform_indices = @transform_5, window_bounds = array<i64: 8, 1>}, {pipeline_mode = #tpu.pipeline_mode<synchronous>, transform_indices = @transform_6, window_bounds = array<i64: 8, 8>}, {pipeline_mode = #tpu.pipeline_mode<synchronous>, transform_indices = @transform_7, window_bounds = array<i64: 1, 1>}, {transform_indices = @transform_8, window_bounds = array<i64: 1, 1, 128>}, {transform_indices = @transform_9, window_bounds = array<i64: 1, 1, 1, 1>}, {transform_indices = @transform_10, window_bounds = array<i64: 1, 1, 1, 1>}]} {
    %c0 = arith.constant 0 : index
    %c0_0 = arith.constant 0 : index
    %c0_1 = arith.constant 0 : index
    %0 = vector.load %arg2[%c0, %c0_0, %c0_1] : memref<1x4x128xf32, #tpu.memory_space<vmem>>, vector<1x4x128xf32>
    %1 = vector.shape_cast %0 : vector<1x4x128xf32> to vector<4x128xf32>
    %c0_2 = arith.constant 0 : index
    %c0_3 = arith.constant 0 : index
    %c0_4 = arith.constant 0 : index
    %2 = vector.load %arg3[%c0_2, %c0_3, %c0_4] : memref<1x4x128xf32, #tpu.memory_space<vmem>>, vector<1x4x128xf32>
    %3 = vector.shape_cast %2 : vector<1x4x128xf32> to vector<4x128xf32>
    %c0_5 = arith.constant 0 : index
    %c0_6 = arith.constant 0 : index
    %4 = vector.load %arg4[%c0_5, %c0_6] : memref<8x4xf32, #tpu.memory_space<vmem>>, vector<8x4xf32>
    %cst = arith.constant dense<0.000000e+00> : vector<8x128xf32>
    %5 = tpu.matmul %4, %1, %cst {dimension_numbers = #tpu.dot_dimension_numbers<[1], [0], [0], [1], [0, 0, 1, 1], [], []>} : vector<8x4xf32>, vector<4x128xf32>, vector<8x128xf32> -> vector<8x128xf32>
    %c0_7 = arith.constant 0 : index
    %c0_8 = arith.constant 0 : index
    %6 = vector.load %arg5[%c0_7, %c0_8] : memref<8x1xf32, #tpu.memory_space<vmem>>, vector<8x1xf32>
    %7 = vector.broadcast %6 : vector<8x1xf32> to vector<8x128xf32>
    %8 = arith.addf %5, %7 : vector<8x128xf32>
    %c0_9 = arith.constant 0 : index
    %c0_10 = arith.constant 0 : index
    %9 = vector.load %arg6[%c0_9, %c0_10] : memref<8x4xf32, #tpu.memory_space<vmem>>, vector<8x4xf32>
    %cst_11 = arith.constant dense<0.000000e+00> : vector<8x128xf32>
    %10 = tpu.matmul %9, %3, %cst_11 {dimension_numbers = #tpu.dot_dimension_numbers<[1], [0], [0], [1], [0, 0, 1, 1], [], []>} : vector<8x4xf32>, vector<4x128xf32>, vector<8x128xf32> -> vector<8x128xf32>
    %c0_12 = arith.constant 0 : index
    %c0_13 = arith.constant 0 : index
    %11 = vector.load %arg7[%c0_12, %c0_13] : memref<8x1xf32, #tpu.memory_space<vmem>>, vector<8x1xf32>
    %12 = vector.broadcast %11 : vector<8x1xf32> to vector<8x128xf32>
    %13 = arith.addf %10, %12 : vector<8x128xf32>
    %14 = arith.addf %8, %13 : vector<8x128xf32>
    %cst_14 = arith.constant 0.000000e+00 : f32
    %15 = vector.broadcast %cst_14 : f32 to vector<8x128xf32>
    %16 = arith.maximumf %14, %15 : vector<8x128xf32>
    %c0_15 = arith.constant 0 : index
    %c0_16 = arith.constant 0 : index
    %17 = vector.load %arg8[%c0_15, %c0_16] : memref<8x8xf32, #tpu.memory_space<vmem>>, vector<8x8xf32>
    %cst_17 = arith.constant dense<0.000000e+00> : vector<8x128xf32>
    %18 = tpu.matmul %17, %16, %cst_17 {dimension_numbers = #tpu.dot_dimension_numbers<[1], [0], [0], [1], [0, 0, 1, 1], [], []>} : vector<8x8xf32>, vector<8x128xf32>, vector<8x128xf32> -> vector<8x128xf32>
    %19 = vector.extract_strided_slice %18 {offsets = [0, 0], sizes = [1, 128], strides = [1, 1]} : vector<8x128xf32> to vector<1x128xf32>
    %c0_18 = arith.constant 0 : index
    %c0_19 = arith.constant 0 : index
    %20 = vector.load %arg9[%c0_18, %c0_19] : memref<1x1xf32, #tpu.memory_space<vmem>>, vector<1x1xf32>
    %21 = vector.broadcast %20 : vector<1x1xf32> to vector<1x128xf32>
    %22 = arith.addf %19, %21 : vector<1x128xf32>
    %c0_20 = arith.constant 0 : index
    %c0_21 = arith.constant 0 : index
    %c0_22 = arith.constant 0 : index
    %23 = vector.load %arg10[%c0_20, %c0_21, %c0_22] : memref<1x1x128xf32, #tpu.memory_space<vmem>>, vector<1x1x128xf32>
    %24 = vector.shape_cast %23 : vector<1x1x128xf32> to vector<1x128xf32>
    %25 = vector.shape_cast %22 : vector<1x128xf32> to vector<1x1x128xf32>
    tpu.vector_store %arg10[%c0_20, %c0_21, %c0_22], %25 {strides = array<i32>} : memref<1x1x128xf32, #tpu.memory_space<vmem>>, vector<1x1x128xf32>,
    %cst_23 = arith.constant dense<0.000000e+00> : vector<1xf32>
    %26 = vector.multi_reduction <add>, %22, %cst_23 [1] : vector<1x128xf32> to vector<1xf32>
    %27 = vector.shape_cast %26 : vector<1xf32> to vector<1x1xf32>
    %28 = vector.shape_cast %27 : vector<1x1xf32> to vector<1x1x1x1xf32>
    %c0_24 = arith.constant 0 : index
    %c0_25 = arith.constant 0 : index
    %c0_26 = arith.constant 0 : index
    %c0_27 = arith.constant 0 : index
    %29 = vector.load %arg11[%c0_24, %c0_25, %c0_26, %c0_27] : memref<1x1x1x1xf32, #tpu.memory_space<vmem>>, vector<1x1x1x1xf32>
    tpu.vector_store %arg11[%c0_24, %c0_25, %c0_26, %c0_27], %28 {strides = array<i32>} : memref<1x1x1x1xf32, #tpu.memory_space<vmem>>, vector<1x1x1x1xf32>,
    %30 = arith.mulf %22, %22 : vector<1x128xf32>
    %cst_28 = arith.constant dense<0.000000e+00> : vector<1xf32>
    %31 = vector.multi_reduction <add>, %30, %cst_28 [1] : vector<1x128xf32> to vector<1xf32>
    %32 = vector.shape_cast %31 : vector<1xf32> to vector<1x1xf32>
    %33 = vector.shape_cast %32 : vector<1x1xf32> to vector<1x1x1x1xf32>
    %c0_29 = arith.constant 0 : index
    %c0_30 = arith.constant 0 : index
    %c0_31 = arith.constant 0 : index
    %c0_32 = arith.constant 0 : index
    %34 = vector.load %arg12[%c0_29, %c0_30, %c0_31, %c0_32] : memref<1x1x1x1xf32, #tpu.memory_space<vmem>>, vector<1x1x1x1xf32>
    tpu.vector_store %arg12[%c0_29, %c0_30, %c0_31, %c0_32], %33 {strides = array<i32>} : memref<1x1x1x1xf32, #tpu.memory_space<vmem>>, vector<1x1x1x1xf32>,
    return
  }
  func.func @transform_0(%arg0: i32, %arg1: i32) -> (i32, i32, i32) {
    %c0_i32 = arith.constant 0 : i32
    %c0_i32_0 = arith.constant 0 : i32
    return %arg0, %c0_i32, %arg1 : i32, i32, i32
  }
  func.func @transform_1(%arg0: i32, %arg1: i32) -> (i32, i32, i32) {
    %c0_i32 = arith.constant 0 : i32
    %c0_i32_0 = arith.constant 0 : i32
    return %arg0, %c0_i32, %arg1 : i32, i32, i32
  }
  func.func @transform_2(%arg0: i32, %arg1: i32) -> (i32, i32) {
    %c0_i32 = arith.constant 0 : i32
    %c0_i32_0 = arith.constant 0 : i32
    %c0_i32_1 = arith.constant 0 : i32
    return %c0_i32, %c0_i32_0 : i32, i32
  }
  func.func @transform_3(%arg0: i32, %arg1: i32) -> (i32, i32) {
    %c0_i32 = arith.constant 0 : i32
    %c0_i32_0 = arith.constant 0 : i32
    %c0_i32_1 = arith.constant 0 : i32
    return %c0_i32, %c0_i32_0 : i32, i32
  }
  func.func @transform_4(%arg0: i32, %arg1: i32) -> (i32, i32) {
    %c0_i32 = arith.constant 0 : i32
    %c0_i32_0 = arith.constant 0 : i32
    %c0_i32_1 = arith.constant 0 : i32
    return %c0_i32, %c0_i32_0 : i32, i32
  }
  func.func @transform_5(%arg0: i32, %arg1: i32) -> (i32, i32) {
    %c0_i32 = arith.constant 0 : i32
    %c0_i32_0 = arith.constant 0 : i32
    %c0_i32_1 = arith.constant 0 : i32
    return %c0_i32, %c0_i32_0 : i32, i32
  }
  func.func @transform_6(%arg0: i32, %arg1: i32) -> (i32, i32) {
    %c0_i32 = arith.constant 0 : i32
    %c0_i32_0 = arith.constant 0 : i32
    %c0_i32_1 = arith.constant 0 : i32
    return %c0_i32, %c0_i32_0 : i32, i32
  }
  func.func @transform_7(%arg0: i32, %arg1: i32) -> (i32, i32) {
    %c0_i32 = arith.constant 0 : i32
    %c0_i32_0 = arith.constant 0 : i32
    %c0_i32_1 = arith.constant 0 : i32
    return %c0_i32, %c0_i32_0 : i32, i32
  }
  func.func @transform_8(%arg0: i32, %arg1: i32) -> (i32, i32, i32) {
    %c0_i32 = arith.constant 0 : i32
    %c0_i32_0 = arith.constant 0 : i32
    return %arg0, %c0_i32, %arg1 : i32, i32, i32
  }
  func.func @transform_9(%arg0: i32, %arg1: i32) -> (i32, i32, i32, i32) {
    %c0_i32 = arith.constant 0 : i32
    %c0_i32_0 = arith.constant 0 : i32
    %c0_i32_1 = arith.constant 0 : i32
    return %arg0, %arg1, %c0_i32, %c0_i32_0 : i32, i32, i32, i32
  }
  func.func @transform_10(%arg0: i32, %arg1: i32) -> (i32, i32, i32, i32) {
    %c0_i32 = arith.constant 0 : i32
    %c0_i32_0 = arith.constant 0 : i32
    %c0_i32_1 = arith.constant 0 : i32
    return %arg0, %arg1, %c0_i32, %c0_i32_0 : i32, i32, i32, i32
  }
}

module attributes {stable_mosaic.version = 11 : i64} {
  func.func @_apply_gate_kernel(%arg0: i32, %arg1: i32, %arg2: memref<1x4x128xf32, #tpu.memory_space<vmem>>, %arg3: memref<1x1x128xf32, #tpu.memory_space<vmem>>, %arg4: memref<1x1xf32, #tpu.memory_space<vmem>>, %arg5: memref<1x1xf32, #tpu.memory_space<vmem>>, %arg6: memref<1x4x128xf32, #tpu.memory_space<vmem>>) attributes {dimension_semantics = [#tpu.dimension_semantics<parallel>, #tpu.dimension_semantics<parallel>], iteration_bounds = array<i64: 2, 2>, scalar_prefetch = 0 : i64, scratch_operands = 0 : i64, tpu.core_type = #tpu.core_type<tc>, window_params = [{transform_indices = @transform_0, window_bounds = array<i64: 1, 4, 128>}, {transform_indices = @transform_1, window_bounds = array<i64: 1, 1, 128>}, {pipeline_mode = #tpu.pipeline_mode<synchronous>, transform_indices = @transform_2, window_bounds = array<i64: 1, 1>}, {pipeline_mode = #tpu.pipeline_mode<synchronous>, transform_indices = @transform_3, window_bounds = array<i64: 1, 1>}, {transform_indices = @transform_4, window_bounds = array<i64: 1, 4, 128>}]} {
    %c0 = arith.constant 0 : index
    %c0_0 = arith.constant 0 : index
    %c0_1 = arith.constant 0 : index
    %0 = vector.load %arg3[%c0, %c0_0, %c0_1] : memref<1x1x128xf32, #tpu.memory_space<vmem>>, vector<1x1x128xf32>
    %1 = vector.shape_cast %0 : vector<1x1x128xf32> to vector<1x128xf32>
    %c0_2 = arith.constant 0 : index
    %c0_3 = arith.constant 0 : index
    %2 = vector.load %arg4[%c0_2, %c0_3] : memref<1x1xf32, #tpu.memory_space<vmem>>, vector<1x1xf32>
    %3 = vector.broadcast %2 : vector<1x1xf32> to vector<1x128xf32>
    %4 = arith.mulf %1, %3 : vector<1x128xf32>
    %c0_4 = arith.constant 0 : index
    %c0_5 = arith.constant 0 : index
    %5 = vector.load %arg5[%c0_4, %c0_5] : memref<1x1xf32, #tpu.memory_space<vmem>>, vector<1x1xf32>
    %6 = vector.broadcast %5 : vector<1x1xf32> to vector<1x128xf32>
    %7 = arith.addf %4, %6 : vector<1x128xf32>
    %8 = arith.negf %7 : vector<1x128xf32>
    %9 = math.exp %8 : vector<1x128xf32>
    %cst = arith.constant 1.000000e+00 : f32
    %10 = vector.broadcast %cst : f32 to vector<1x128xf32>
    %11 = arith.addf %10, %9 : vector<1x128xf32>
    %12 = arith.divf %10, %11 : vector<1x128xf32>
    %c0_6 = arith.constant 0 : index
    %c0_7 = arith.constant 0 : index
    %c0_8 = arith.constant 0 : index
    %13 = vector.load %arg2[%c0_6, %c0_7, %c0_8] : memref<1x4x128xf32, #tpu.memory_space<vmem>>, vector<1x4x128xf32>
    %14 = vector.shape_cast %13 : vector<1x4x128xf32> to vector<4x128xf32>
    %15 = vector.broadcast %12 : vector<1x128xf32> to vector<4x128xf32>
    %16 = arith.mulf %14, %15 : vector<4x128xf32>
    %c0_9 = arith.constant 0 : index
    %c0_10 = arith.constant 0 : index
    %c0_11 = arith.constant 0 : index
    %17 = vector.load %arg6[%c0_9, %c0_10, %c0_11] : memref<1x4x128xf32, #tpu.memory_space<vmem>>, vector<1x4x128xf32>
    %18 = vector.shape_cast %17 : vector<1x4x128xf32> to vector<4x128xf32>
    %19 = vector.shape_cast %16 : vector<4x128xf32> to vector<1x4x128xf32>
    tpu.vector_store %arg6[%c0_9, %c0_10, %c0_11], %19 {strides = array<i32>} : memref<1x4x128xf32, #tpu.memory_space<vmem>>, vector<1x4x128xf32>,
    return
  }
  func.func @transform_0(%arg0: i32, %arg1: i32) -> (i32, i32, i32) {
    %c0_i32 = arith.constant 0 : i32
    %c0_i32_0 = arith.constant 0 : i32
    return %arg0, %c0_i32, %arg1 : i32, i32, i32
  }
  func.func @transform_1(%arg0: i32, %arg1: i32) -> (i32, i32, i32) {
    %c0_i32 = arith.constant 0 : i32
    %c0_i32_0 = arith.constant 0 : i32
    return %arg0, %c0_i32, %arg1 : i32, i32, i32
  }
  func.func @transform_2(%arg0: i32, %arg1: i32) -> (i32, i32) {
    %c0_i32 = arith.constant 0 : i32
    %c0_i32_0 = arith.constant 0 : i32
    %c0_i32_1 = arith.constant 0 : i32
    return %c0_i32, %c0_i32_0 : i32, i32
  }
  func.func @transform_3(%arg0: i32, %arg1: i32) -> (i32, i32) {
    %c0_i32 = arith.constant 0 : i32
    %c0_i32_0 = arith.constant 0 : i32
    %c0_i32_1 = arith.constant 0 : i32
    return %c0_i32, %c0_i32_0 : i32, i32
  }
  func.func @transform_4(%arg0: i32, %arg1: i32) -> (i32, i32, i32) {
    %c0_i32 = arith.constant 0 : i32
    %c0_i32_0 = arith.constant 0 : i32
    return %arg0, %c0_i32, %arg1 : i32, i32, i32
  }
}

</mosaic_0001>

<llo_original>
// kernel: attention_block_forward.5
$region0: #{attention_block_forward.5}
  #allocation0 [shape = 'u32[]', space=smem, size = 0x4, offset = 0x4, fixed_abs, tag = 'smem constant byte address 0x4 - core index']
  #allocation1 [shape = 'u32[72,128]{1,0:T(1,128)}', space=vmem, size = 0x9000, scoped, tag = 'internal scratch']
  #allocation2 [shape = 'f32[1,1]{1,0:T(1,128)S(1)}', space=vmem, size = 0x200, scoped, tag = 'scoped memory for attention_block_forward.5']
  #allocation3 [shape = 'f32[1,1]{1,0:T(1,128)S(1)}', space=vmem, size = 0x200, scoped, tag = 'scoped memory for attention_block_forward.5']
  %s0 = inlined_call_operand.vmem [shape: f32[2,4,256], index: 0, kind: input, shape index: {}]
  %s1 = inlined_call_operand.vmem [shape: f32[2,1,256], index: 1, kind: input, shape index: {}]
  %s2 = inlined_call_operand.<no memory space> [shape: f32[1,1], index: 2, kind: input, shape index: {}]
  %s3 = inlined_call_operand.<no memory space> [shape: f32[1,1], index: 3, kind: input, shape index: {}]
  %s4 = inlined_call_operand.vmem [shape: f32[2,4,256], index: 4, kind: output, shape index: {}]
  %s5 = sld [smem:[#allocation0]]
  $region49: #{attention_block_forward.5} parent=0
    _
  %s7 = ssub.s32 1, %s5
  %s8 = scalar_select 0, %s7, %s5
  %v9 = vstv %s2
  %10 = vst [vmem:[#allocation2] sm:$0x1] %v9
  %v11 = vstv %s3
  %12 = vst [vmem:[#allocation3] sm:$0x1] %v11
  loop: start=0, step=1, limit=6
  $region2: #{attention_block_forward.5} parent=0 // loop_pre_header
    _
  $region3: #{attention_block_forward.5} parent=0 // loop_header
    %s14 = sphi 0, %s18
    %p15 = scmp.ge.s32.totalorder %s14, 6
    %s21 = sphi 0, %s33
    %s22 = sphi 0, %s29
    %s23 = sphi 0, %s21
    %s24 = sphi 0, %s22
    %s25 = sphi 0, %s23
    %s26 = sphi 0, %s24
    %s38 = sphi 0, %s40
    %s41 = sphi 0, %s38
    %s42 = sphi 0, %s41
    %s58 = sphi 0, %s42
    %s66 = sphi 0, %s68
    %s69 = sphi 0, %s66
    %s70 = sphi 0, %s69
    %s86 = sphi 0, %s70
    %s90 = sphi 0, %s90
    %s92 = sphi 0, %s90
    %s93 = sphi 0, %s92
    %s107 = sphi 0, %s93
    %s111 = sphi 0, %s111
    %s113 = sphi 0, %s111
    %s114 = sphi 0, %s113
    %s128 = sphi 0, %s114
    %s136 = sphi 0, %s138
    %s139 = sphi 0, %s136
    %s140 = sphi 0, %s139
    %s156 = sphi 0, %s140
  $region4: #{attention_block_forward.5} parent=0 // loop_header_branch
    %17 = sbr.rel (%p15) target = $region8
  $region5: #{attention_block_forward.5} parent=0 // loop_body
    %s19 = ssub.s32 %s14, 1
    %s20 = ssub.s32 %s14, 2
    %s27 = sadd.s32 1, %s22
    %p28 = scmp.ge.s32.totalorder %s27, 2
    %s29 = scalar_select %p28, 0, %s27
    %s30 = sadd.s32 1, %s21
    %s31 = scalar_select %p28, %s30, %s21
    %p32 = scmp.ge.s32.totalorder %s31, 2
    %s33 = scalar_select %p32, 0, %s31
    %s34 = ssub.s32 %s21, %s33
    %s35 = ssub.s32 %s22, %s29
    %s36 = sor.u32 %s34, %s35
    %p37 = scmp.eq.s32.totalorder %s36, 0
    %s39 = sadd.s32 %s38, 1
    %s40 = scalar_select %p37, %s38, %s39
    %p43 = pneg %p37
    %p44 = scmp.eq.s32.totalorder %s14, 3
    %p45 = por %p43, %p44
    %p46 = scmp.ne.s32.totalorder %s38, %s41
    %p47 = scmp.eq.s32.totalorder %s14, 0
    %p48 = por %p46, %p47
    %p49 = scmp.ne.s32.totalorder %s38, %s41
    %p50 = scmp.eq.s32.totalorder %s19, 3
    %p51 = por %p49, %p50
    %p52 = scmp.ne.s32.totalorder %s41, %s42
    %p53 = scmp.eq.s32.totalorder %s19, 0
    %p54 = por %p52, %p53
    %p55 = scmp.ne.s32.totalorder %s41, %s42
    %p56 = scmp.eq.s32.totalorder %s20, 3
    %p57 = por %p55, %p56
    %p59 = scmp.ne.s32.totalorder %s42, %s58
    %p60 = scmp.eq.s32.totalorder %s20, 0
    %p61 = por %p59, %p60
    %s62 = ssub.s32 %s21, %s33
    %s63 = ssub.s32 %s22, %s29
    %s64 = sor.u32 %s62, %s63
    %p65 = scmp.eq.s32.totalorder %s64, 0
    %s67 = sadd.s32 %s66, 1
    %s68 = scalar_select %p65, %s66, %s67
    %p71 = pneg %p65
    %p72 = scmp.eq.s32.totalorder %s14, 3
    %p73 = por %p71, %p72
    %p74 = scmp.ne.s32.totalorder %s66, %s69
    %p75 = scmp.eq.s32.totalorder %s14, 0
    %p76 = por %p74, %p75
    %p77 = scmp.ne.s32.totalorder %s66, %s69
    %p78 = scmp.eq.s32.totalorder %s19, 3
    %p79 = por %p77, %p78
    %p80 = scmp.ne.s32.totalorder %s69, %s70
    %p81 = scmp.eq.s32.totalorder %s19, 0
    %p82 = por %p80, %p81
    %p83 = scmp.ne.s32.totalorder %s69, %s70
    %p84 = scmp.eq.s32.totalorder %s20, 3
    %p85 = por %p83, %p84
    %p87 = scmp.ne.s32.totalorder %s70, %s86
    %p88 = scmp.eq.s32.totalorder %s20, 0
    %p89 = por %p87, %p88
    %s91 = sadd.s32 %s90, 1
    %p94 = scmp.eq.s32.totalorder %s14, 3
    %p95 = scmp.ne.s32.totalorder %s90, %s92
    %p96 = scmp.eq.s32.totalorder %s14, 0
    %p97 = por %p95, %p96
    %p98 = scmp.ne.s32.totalorder %s90, %s92
    %p99 = scmp.eq.s32.totalorder %s19, 3
    %p100 = por %p98, %p99
    %p101 = scmp.ne.s32.totalorder %s92, %s93
    %p102 = scmp.eq.s32.totalorder %s19, 0
    %p103 = por %p101, %p102
    %p104 = scmp.ne.s32.totalorder %s92, %s93
    %p105 = scmp.eq.s32.totalorder %s20, 3
    %p106 = por %p104, %p105
    %p108 = scmp.ne.s32.totalorder %s93, %s107
    %p109 = scmp.eq.s32.totalorder %s20, 0
    %p110 = por %p108, %p109
    %s112 = sadd.s32 %s111, 1
    %p115 = scmp.eq.s32.totalorder %s14, 3
    %p116 = scmp.ne.s32.totalorder %s111, %s113
    %p117 = scmp.eq.s32.totalorder %s14, 0
    %p118 = por %p116, %p117
    %p119 = scmp.ne.s32.totalorder %s111, %s113
    %p120 = scmp.eq.s32.totalorder %s19, 3
    %p121 = por %p119, %p120
    %p122 = scmp.ne.s32.totalorder %s113, %s114
    %p123 = scmp.eq.s32.totalorder %s19, 0
    %p124 = por %p122, %p123
    %p125 = scmp.ne.s32.totalorder %s113, %s114
    %p126 = scmp.eq.s32.totalorder %s20, 3
    %p127 = por %p125, %p126
    %p129 = scmp.ne.s32.totalorder %s114, %s128
    %p130 = scmp.eq.s32.totalorder %s20, 0
    %p131 = por %p129, %p130
    %s132 = ssub.s32 %s21, %s33
    %s133 = ssub.s32 %s22, %s29
    %s134 = sor.u32 %s132, %s133
    %p135 = scmp.eq.s32.totalorder %s134, 0
    %s137 = sadd.s32 %s136, 1
    %s138 = scalar_select %p135, %s136, %s137
    %p141 = pneg %p135
    %p142 = scmp.eq.s32.totalorder %s14, 3
    %p143 = por %p141, %p142
    %p144 = scmp.ne.s32.totalorder %s136, %s139
    %p145 = scmp.eq.s32.totalorder %s14, 0
    %p146 = por %p144, %p145
    %p147 = scmp.ne.s32.totalorder %s136, %s139
    %p148 = scmp.eq.s32.totalorder %s19, 3
    %p149 = por %p147, %p148
    %p150 = scmp.ne.s32.totalorder %s139, %s140
    %p151 = scmp.eq.s32.totalorder %s19, 0
    %p152 = por %p150, %p151
    %p153 = scmp.ne.s32.totalorder %s139, %s140
    %p154 = scmp.eq.s32.totalorder %s20, 3
    %p155 = por %p153, %p154
    %p157 = scmp.ne.s32.totalorder %s140, %s156
    %p158 = scmp.eq.s32.totalorder %s20, 0
    %p159 = por %p157, %p158
    %p160 = scmp.le.s32.totalorder 1, %s14
    %p161 = scmp.lt.s32.totalorder %s14, 5
    %p162 = pnand %p160, %p161
    %p163 = pneg %p162
    // Predicated region
    $region9: #{attention_block_forward.5} parent=5 // pred_check
      _
    $region10: #{attention_block_forward.5} parent=5 // pred_check_branch
      %165 = sbr.rel (%p162) target = $region12
    $region11: #{attention_block_forward.5} parent=5 // pred_region
      %s166 = ssub.s32 %s14, 1
      // Predicated region
      $region13: #{attention_block_forward.5} parent=11 // pred_check
        %p167 = pneg %p103
      $region14: #{attention_block_forward.5} parent=11 // pred_check_branch
        %169 = sbr.rel (%p167) target = $region16
      $region15: #{attention_block_forward.5} parent=11 // pred_region
        _
      $region16: #{attention_block_forward.5} parent=11 // pred_fallthru
        _
      // Predicated region
      $region17: #{attention_block_forward.5} parent=11 // pred_check
        %p170 = pneg %p124
      $region18: #{attention_block_forward.5} parent=11 // pred_check_branch
        %172 = sbr.rel (%p170) target = $region20
      $region19: #{attention_block_forward.5} parent=11 // pred_region
        _
      $region20: #{attention_block_forward.5} parent=11 // pred_fallthru
        _
    $region12: #{attention_block_forward.5} parent=5 // pred_fallthru
      _
    %p173 = scmp.lt.s32.totalorder %s14, 4
    // Predicated region
    $region21: #{attention_block_forward.5} parent=5 // pred_check
      %p174 = pneg %p173
    $region22: #{attention_block_forward.5} parent=5 // pred_check_branch
      %176 = sbr.rel (%p174) target = $region24
    $region23: #{attention_block_forward.5} parent=5 // pred_region
      // Predicated region
      $region25: #{attention_block_forward.5} parent=23 // pred_check
        %p177 = pneg %p48
      $region26: #{attention_block_forward.5} parent=23 // pred_check_branch
        %179 = sbr.rel (%p177) target = $region28
      $region27: #{attention_block_forward.5} parent=23 // pred_region
        %p180 = scmp.lt.s32.totalorder %s21, 1
        %s181 = scalar_select %p180, %s21, 1
        %p182 = scmp.lt.s32.totalorder %s22, 1
        %s183 = scalar_select %p182, %s22, 1
        %s184 = smul.addr %s181, 2
        %s185 = sadd.s32 %s183, %s184
        %s186 = smul.addr %s185, 4
        %s187 = scalar_lea.vmem %s0, %s186
      $region28: #{attention_block_forward.5} parent=23 // pred_fallthru
        _
      // Predicated region
      $region29: #{attention_block_forward.5} parent=23 // pred_check
        %p188 = pneg %p76
      $region30: #{attention_block_forward.5} parent=23 // pred_check_branch
        %190 = sbr.rel (%p188) target = $region32
      $region31: #{attention_block_forward.5} parent=23 // pred_region
        %p191 = scmp.lt.s32.totalorder %s21, 1
        %s192 = scalar_select %p191, %s21, 1
        %p193 = scmp.lt.s32.totalorder %s22, 1
        %s194 = scalar_select %p193, %s22, 1
        %s195 = smul.addr %s192, 2
        %s196 = sadd.s32 %s194, %s195
        %s197 = scalar_lea.vmem %s1, %s196
      $region32: #{attention_block_forward.5} parent=23 // pred_fallthru
        _
    $region24: #{attention_block_forward.5} parent=5 // pred_fallthru
      _
    %p198 = scmp.le.s32.totalorder 1, %s14
    %p199 = scmp.lt.s32.totalorder %s14, 5
    %p200 = pnand %p198, %p199
    %p201 = pneg %p200
    // Predicated region
    $region33: #{attention_block_forward.5} parent=5 // pred_check
      _
    $region34: #{attention_block_forward.5} parent=5 // pred_check_branch
      %203 = sbr.rel (%p200) target = $region36
    $region35: #{attention_block_forward.5} parent=5 // pred_region
      %s204 = ssub.s32 %s14, 1
      %p205 = scmp.lt.s32.totalorder %s23, 1
      %s206 = scalar_select %p205, %s23, 1
      %p207 = scmp.lt.s32.totalorder %s24, 1
      %s208 = scalar_select %p207, %s24, 1
      %s209 = smul.addr %s206, 2
      %s210 = sadd.s32 %s208, %s209
      %s211 = smul.addr %s210, 4
      %s212 = scalar_lea.vmem %s0, %s211
      %p213 = pneg %p54
      %p214 = pneg %p51
      %p215 = scmp.lt.s32.totalorder %s23, 1
      %s216 = scalar_select %p215, %s23, 1
      %p217 = scmp.lt.s32.totalorder %s24, 1
      %s218 = scalar_select %p217, %s24, 1
      %s219 = smul.addr %s216, 2
      %s220 = sadd.s32 %s218, %s219
      %s221 = scalar_lea.vmem %s1, %s220
      %p222 = pneg %p82
      %p223 = pneg %p79
      %p224 = pneg %p103
      %p225 = pneg %p100
      %p226 = pneg %p124
      %p227 = pneg %p121
      %p228 = pneg %p152
      %p229 = pneg %p149
      %p230 = scmp.lt.s32.totalorder %s23, 1
      %s231 = scalar_select %p230, %s23, 1
      %p232 = scmp.lt.s32.totalorder %s24, 1
      %s233 = scalar_select %p232, %s24, 1
      %s234 = smul.addr %s231, 2
      %s235 = sadd.s32 %s233, %s234
      %s236 = smul.addr %s235, 4
      %s237 = scalar_lea.vmem %s4, %s236
      %p238 = scmp.lt.s32.totalorder %s23, 1
      %s239 = scalar_select %p238, %s23, 1
      %p240 = scmp.lt.s32.totalorder %s24, 1
      %s241 = scalar_select %p240, %s24, 1
      %s242 = smul.addr %s239, 2
      %s243 = sadd.s32 %s241, %s242
      %s244 = smul.addr %s243, 4
      %s245 = scalar_lea.vmem %s0, %s244
      %p246 = scmp.lt.s32.totalorder %s23, 1
      %s247 = scalar_select %p246, %s23, 1
      %p248 = scmp.lt.s32.totalorder %s24, 1
      %s249 = scalar_select %p248, %s24, 1
      %s250 = smul.addr %s247, 2
      %s251 = sadd.s32 %s249, %s250
      %s252 = scalar_lea.vmem %s1, %s251
      %p253 = scmp.lt.s32.totalorder %s23, 1
      %s254 = scalar_select %p253, %s23, 1
      %p255 = scmp.lt.s32.totalorder %s24, 1
      %s256 = scalar_select %p255, %s24, 1
      %s257 = smul.addr %s254, 2
      %s258 = sadd.s32 %s256, %s257
      %s259 = smul.addr %s258, 4
      %s260 = scalar_lea.vmem %s4, %s259
      %v261 = vld [vmem:[%s252] sm:$0x1]
      %v262 = vld [vmem:[#allocation2] sm:$0x1]
      %264 = vset.pattern.permute.xlu0 0
      %265 = vperm.xlu0 %264, %v262
      %v266 = vpop.permute.xlu0 %265
      %v268 = vperm.slane %v266, 0
      %v269 = vmul.f32 %v261, %v268
      %v270 = vld [vmem:[#allocation3] sm:$0x1]
      %272 = vset.pattern.permute.xlu0 0
      %273 = vperm.xlu0 %272, %v270
      %v274 = vpop.permute.xlu0 %273
      %v276 = vperm.slane %v274, 0
      %v277 = vadd.f32 %v269, %v276
      %v278 = vxor.u32 %v277, 2147483648
      %v279 = vmul.f32 %v278, 1.442695
      %v280 = vpow.pop %v279
      %v281 = vadd.f32 %v280, 1.0
      %v282 = vrcp.pop %v281
      %v283 = vmul.f32 %v281, %v282
      %v284 = vsub.f32 1.0, %v283
      %v285 = vmul.f32 %v282, %v284
      %v286 = vadd.f32 %v282, %v285
      %vm287 = vweird.f32 %v281
      %vm288 = vweird.f32 %v282
      %vm289 = vmor %vm287, %vm288
      %v290 = vsel %vm289, %v282, %v286
      %v291 = vand.u32 2147483647, %v281
      %vm292 = vcmp.eq.f32.partialorder %v291, 8.507059e+37
      %v293 = vand.u32 %v281, 2147483648
      %v294 = vor.u32 1.1754944e-38, %v293
      %v295 = vsel %vm292, %v294, %v290
      %v296 = vmul.f32 1.0, %v295
      %v297 = vld [vmem:[%s245] sm:$0xf]
      %v299 = vperm.slane %v296, 0
      %v301 = vmul.f32 %v297, %v299
      %302 = vst [vmem:[%s260] sm:$0xf] %v301
      %p303 = scmp.lt.s32.totalorder %s23, 1
      %s304 = scalar_select %p303, %s23, 1
      %p305 = scmp.lt.s32.totalorder %s24, 1
      %s306 = scalar_select %p305, %s24, 1
      %s307 = smul.addr %s304, 2
      %s308 = sadd.s32 %s306, %s307
      %s309 = smul.addr %s308, 4
      %s310 = scalar_lea.vmem %s4, %s309
      // Predicated region
      $region37: #{attention_block_forward.5} parent=35 // pred_check
        %p311 = pneg %p149
      $region38: #{attention_block_forward.5} parent=35 // pred_check_branch
        %313 = sbr.rel (%p311) target = $region40
      $region39: #{attention_block_forward.5} parent=35 // pred_region
        _
      $region40: #{attention_block_forward.5} parent=35 // pred_fallthru
        _
    $region36: #{attention_block_forward.5} parent=5 // pred_fallthru
      _
    %p314 = scmp.le.s32.totalorder 2, %s14
    // Predicated region
    $region41: #{attention_block_forward.5} parent=5 // pred_check
      %p315 = pneg %p314
    $region42: #{attention_block_forward.5} parent=5 // pred_check_branch
      %317 = sbr.rel (%p315) target = $region44
    $region43: #{attention_block_forward.5} parent=5 // pred_region
      %s318 = ssub.s32 %s14, 2
      // Predicated region
      $region45: #{attention_block_forward.5} parent=43 // pred_check
        %p319 = pneg %p155
      $region46: #{attention_block_forward.5} parent=43 // pred_check_branch
        %321 = sbr.rel (%p319) target = $region48
      $region47: #{attention_block_forward.5} parent=43 // pred_region
        %p322 = scmp.lt.s32.totalorder %s25, 1
        %s323 = scalar_select %p322, %s25, 1
        %p324 = scmp.lt.s32.totalorder %s26, 1
        %s325 = scalar_select %p324, %s26, 1
        %s326 = smul.addr %s323, 2
        %s327 = sadd.s32 %s325, %s326
        %s328 = smul.addr %s327, 4
        %s329 = scalar_lea.vmem %s4, %s328
      $region48: #{attention_block_forward.5} parent=43 // pred_fallthru
        _
    $region44: #{attention_block_forward.5} parent=5 // pred_fallthru
      _
  $region6: #{attention_block_forward.5} parent=0 // loop_footer
    %s18 = sadd.s32 1, %s14
  $region7: #{attention_block_forward.5} parent=0 // loop_footer_branch
    %13 = sbr.rel target = $region3
  $region8: #{attention_block_forward.5} parent=0 // loop_exit
    _

// kernel: attention_block_forward.3
$region0: #{attention_block_forward.3}
  #allocation0 [shape = 'u32[]', space=smem, size = 0x4, offset = 0x4, fixed_abs, tag = 'smem constant byte address 0x4 - core index']
  #allocation1 [shape = 'u32[72,128]{1,0:T(1,128)}', space=vmem, size = 0x9000, scoped, tag = 'internal scratch']
  %s0 = inlined_call_operand.vmem [shape: f32[2,4,256], index: 0, kind: input, shape index: {}]
  %s1 = inlined_call_operand.vmem [shape: f32[2,4,256], index: 1, kind: input, shape index: {}]
  %s2 = inlined_call_operand.vmem [shape: f32[8,4], index: 2, kind: input, shape index: {}]
  %s3 = inlined_call_operand.vmem [shape: f32[8,1], index: 3, kind: input, shape index: {}]
  %s4 = inlined_call_operand.vmem [shape: f32[8,4], index: 4, kind: input, shape index: {}]
  %s5 = inlined_call_operand.vmem [shape: f32[8,1], index: 5, kind: input, shape index: {}]
  %s6 = inlined_call_operand.vmem [shape: f32[2,2,8,1], index: 6, kind: output, shape index: {0}]
  %s7 = inlined_call_operand.vmem [shape: f32[2,2,8,1], index: 7, kind: output, shape index: {1}]
  %s8 = inlined_call_operand.vmem [shape: f32[2,2,8,1], index: 8, kind: output, shape index: {2}]
  %s9 = inlined_call_operand.vmem [shape: f32[2,2,8,1], index: 9, kind: output, shape index: {3}]
  %10 = xla_tuple %s6, %s7, %s8, %s9
  %s11 = sld [smem:[#allocation0]]
  $region81: #{attention_block_forward.3} parent=0
    _
  %s13 = ssub.s32 1, %s11
  %s14 = scalar_select 0, %s13, %s11
  loop: start=0, step=1, limit=6
  $region2: #{attention_block_forward.3} parent=0 // loop_pre_header
    _
  $region3: #{attention_block_forward.3} parent=0 // loop_header
    %s16 = sphi 0, %s20
    %p17 = scmp.ge.s32.totalorder %s16, 6
    %s23 = sphi 0, %s35
    %s24 = sphi 0, %s31
    %s25 = sphi 0, %s23
    %s26 = sphi 0, %s24
    %s27 = sphi 0, %s25
    %s28 = sphi 0, %s26
    %s40 = sphi 0, %s42
    %s43 = sphi 0, %s40
    %s44 = sphi 0, %s43
    %s60 = sphi 0, %s44
    %s68 = sphi 0, %s70
    %s71 = sphi 0, %s68
    %s72 = sphi 0, %s71
    %s88 = sphi 0, %s72
    %s92 = sphi 0, %s92
    %s94 = sphi 0, %s92
    %s95 = sphi 0, %s94
    %s109 = sphi 0, %s95
    %s113 = sphi 0, %s113
    %s115 = sphi 0, %s113
    %s116 = sphi 0, %s115
    %s130 = sphi 0, %s116
    %s134 = sphi 0, %s134
    %s136 = sphi 0, %s134
    %s137 = sphi 0, %s136
    %s151 = sphi 0, %s137
    %s155 = sphi 0, %s155
    %s157 = sphi 0, %s155
    %s158 = sphi 0, %s157
    %s172 = sphi 0, %s158
    %s180 = sphi 0, %s182
    %s183 = sphi 0, %s180
    %s184 = sphi 0, %s183
    %s200 = sphi 0, %s184
    %s208 = sphi 0, %s210
    %s211 = sphi 0, %s208
    %s212 = sphi 0, %s211
    %s228 = sphi 0, %s212
    %s236 = sphi 0, %s238
    %s239 = sphi 0, %s236
    %s240 = sphi 0, %s239
    %s256 = sphi 0, %s240
    %s264 = sphi 0, %s266
    %s267 = sphi 0, %s264
    %s268 = sphi 0, %s267
    %s284 = sphi 0, %s268
  $region4: #{attention_block_forward.3} parent=0 // loop_header_branch
    %19 = sbr.rel (%p17) target = $region8
  $region5: #{attention_block_forward.3} parent=0 // loop_body
    %s21 = ssub.s32 %s16, 1
    %s22 = ssub.s32 %s16, 2
    %s29 = sadd.s32 1, %s24
    %p30 = scmp.ge.s32.totalorder %s29, 2
    %s31 = scalar_select %p30, 0, %s29
    %s32 = sadd.s32 1, %s23
    %s33 = scalar_select %p30, %s32, %s23
    %p34 = scmp.ge.s32.totalorder %s33, 2
    %s35 = scalar_select %p34, 0, %s33
    %s36 = ssub.s32 %s23, %s35
    %s37 = ssub.s32 %s24, %s31
    %s38 = sor.u32 %s36, %s37
    %p39 = scmp.eq.s32.totalorder %s38, 0
    %s41 = sadd.s32 %s40, 1
    %s42 = scalar_select %p39, %s40, %s41
    %p45 = pneg %p39
    %p46 = scmp.eq.s32.totalorder %s16, 3
    %p47 = por %p45, %p46
    %p48 = scmp.ne.s32.totalorder %s40, %s43
    %p49 = scmp.eq.s32.totalorder %s16, 0
    %p50 = por %p48, %p49
    %p51 = scmp.ne.s32.totalorder %s40, %s43
    %p52 = scmp.eq.s32.totalorder %s21, 3
    %p53 = por %p51, %p52
    %p54 = scmp.ne.s32.totalorder %s43, %s44
    %p55 = scmp.eq.s32.totalorder %s21, 0
    %p56 = por %p54, %p55
    %p57 = scmp.ne.s32.totalorder %s43, %s44
    %p58 = scmp.eq.s32.totalorder %s22, 3
    %p59 = por %p57, %p58
    %p61 = scmp.ne.s32.totalorder %s44, %s60
    %p62 = scmp.eq.s32.totalorder %s22, 0
    %p63 = por %p61, %p62
    %s64 = ssub.s32 %s23, %s35
    %s65 = ssub.s32 %s24, %s31
    %s66 = sor.u32 %s64, %s65
    %p67 = scmp.eq.s32.totalorder %s66, 0
    %s69 = sadd.s32 %s68, 1
    %s70 = scalar_select %p67, %s68, %s69
    %p73 = pneg %p67
    %p74 = scmp.eq.s32.totalorder %s16, 3
    %p75 = por %p73, %p74
    %p76 = scmp.ne.s32.totalorder %s68, %s71
    %p77 = scmp.eq.s32.totalorder %s16, 0
    %p78 = por %p76, %p77
    %p79 = scmp.ne.s32.totalorder %s68, %s71
    %p80 = scmp.eq.s32.totalorder %s21, 3
    %p81 = por %p79, %p80
    %p82 = scmp.ne.s32.totalorder %s71, %s72
    %p83 = scmp.eq.s32.totalorder %s21, 0
    %p84 = por %p82, %p83
    %p85 = scmp.ne.s32.totalorder %s71, %s72
    %p86 = scmp.eq.s32.totalorder %s22, 3
    %p87 = por %p85, %p86
    %p89 = scmp.ne.s32.totalorder %s72, %s88
    %p90 = scmp.eq.s32.totalorder %s22, 0
    %p91 = por %p89, %p90
    %s93 = sadd.s32 %s92, 1
    %p96 = scmp.eq.s32.totalorder %s16, 3
    %p97 = scmp.ne.s32.totalorder %s92, %s94
    %p98 = scmp.eq.s32.totalorder %s16, 0
    %p99 = por %p97, %p98
    %p100 = scmp.ne.s32.totalorder %s92, %s94
    %p101 = scmp.eq.s32.totalorder %s21, 3
    %p102 = por %p100, %p101
    %p103 = scmp.ne.s32.totalorder %s94, %s95
    %p104 = scmp.eq.s32.totalorder %s21, 0
    %p105 = por %p103, %p104
    %p106 = scmp.ne.s32.totalorder %s94, %s95
    %p107 = scmp.eq.s32.totalorder %s22, 3
    %p108 = por %p106, %p107
    %p110 = scmp.ne.s32.totalorder %s95, %s109
    %p111 = scmp.eq.s32.totalorder %s22, 0
    %p112 = por %p110, %p111
    %s114 = sadd.s32 %s113, 1
    %p117 = scmp.eq.s32.totalorder %s16, 3
    %p118 = scmp.ne.s32.totalorder %s113, %s115
    %p119 = scmp.eq.s32.totalorder %s16, 0
    %p120 = por %p118, %p119
    %p121 = scmp.ne.s32.totalorder %s113, %s115
    %p122 = scmp.eq.s32.totalorder %s21, 3
    %p123 = por %p121, %p122
    %p124 = scmp.ne.s32.totalorder %s115, %s116
    %p125 = scmp.eq.s32.totalorder %s21, 0
    %p126 = por %p124, %p125
    %p127 = scmp.ne.s32.totalorder %s115, %s116
    %p128 = scmp.eq.s32.totalorder %s22, 3
    %p129 = por %p127, %p128
    %p131 = scmp.ne.s32.totalorder %s116, %s130
    %p132 = scmp.eq.s32.totalorder %s22, 0
    %p133 = por %p131, %p132
    %s135 = sadd.s32 %s134, 1
    %p138 = scmp.eq.s32.totalorder %s16, 3
    %p139 = scmp.ne.s32.totalorder %s134, %s136
    %p140 = scmp.eq.s32.totalorder %s16, 0
    %p141 = por %p139, %p140
    %p142 = scmp.ne.s32.totalorder %s134, %s136
    %p143 = scmp.eq.s32.totalorder %s21, 3
    %p144 = por %p142, %p143
    %p145 = scmp.ne.s32.totalorder %s136, %s137
    %p146 = scmp.eq.s32.totalorder %s21, 0
    %p147 = por %p145, %p146
    %p148 = scmp.ne.s32.totalorder %s136, %s137
    %p149 = scmp.eq.s32.totalorder %s22, 3
    %p150 = por %p148, %p149
    %p152 = scmp.ne.s32.totalorder %s137, %s151
    %p153 = scmp.eq.s32.totalorder %s22, 0
    %p154 = por %p152, %p153
    %s156 = sadd.s32 %s155, 1
    %p159 = scmp.eq.s32.totalorder %s16, 3
    %p160 = scmp.ne.s32.totalorder %s155, %s157
    %p161 = scmp.eq.s32.totalorder %s16, 0
    %p162 = por %p160, %p161
    %p163 = scmp.ne.s32.totalorder %s155, %s157
    %p164 = scmp.eq.s32.totalorder %s21, 3
    %p165 = por %p163, %p164
    %p166 = scmp.ne.s32.totalorder %s157, %s158
    %p167 = scmp.eq.s32.totalorder %s21, 0
    %p168 = por %p166, %p167
    %p169 = scmp.ne.s32.totalorder %s157, %s158
    %p170 = scmp.eq.s32.totalorder %s22, 3
    %p171 = por %p169, %p170
    %p173 = scmp.ne.s32.totalorder %s158, %s172
    %p174 = scmp.eq.s32.totalorder %s22, 0
    %p175 = por %p173, %p174
    %s176 = ssub.s32 %s23, %s35
    %s177 = ssub.s32 %s24, %s31
    %s178 = sor.u32 %s176, %s177
    %p179 = scmp.eq.s32.totalorder %s178, 0
    %s181 = sadd.s32 %s180, 1
    %s182 = scalar_select %p179, %s180, %s181
    %p185 = pneg %p179
    %p186 = scmp.eq.s32.totalorder %s16, 3
    %p187 = por %p185, %p186
    %p188 = scmp.ne.s32.totalorder %s180, %s183
    %p189 = scmp.eq.s32.totalorder %s16, 0
    %p190 = por %p188, %p189
    %p191 = scmp.ne.s32.totalorder %s180, %s183
    %p192 = scmp.eq.s32.totalorder %s21, 3
    %p193 = por %p191, %p192
    %p194 = scmp.ne.s32.totalorder %s183, %s184
    %p195 = scmp.eq.s32.totalorder %s21, 0
    %p196 = por %p194, %p195
    %p197 = scmp.ne.s32.totalorder %s183, %s184
    %p198 = scmp.eq.s32.totalorder %s22, 3
    %p199 = por %p197, %p198
    %p201 = scmp.ne.s32.totalorder %s184, %s200
    %p202 = scmp.eq.s32.totalorder %s22, 0
    %p203 = por %p201, %p202
    %s204 = ssub.s32 %s23, %s35
    %s205 = ssub.s32 %s24, %s31
    %s206 = sor.u32 %s204, %s205
    %p207 = scmp.eq.s32.totalorder %s206, 0
    %s209 = sadd.s32 %s208, 1
    %s210 = scalar_select %p207, %s208, %s209
    %p213 = pneg %p207
    %p214 = scmp.eq.s32.totalorder %s16, 3
    %p215 = por %p213, %p214
    %p216 = scmp.ne.s32.totalorder %s208, %s211
    %p217 = scmp.eq.s32.totalorder %s16, 0
    %p218 = por %p216, %p217
    %p219 = scmp.ne.s32.totalorder %s208, %s211
    %p220 = scmp.eq.s32.totalorder %s21, 3
    %p221 = por %p219, %p220
    %p222 = scmp.ne.s32.totalorder %s211, %s212
    %p223 = scmp.eq.s32.totalorder %s21, 0
    %p224 = por %p222, %p223
    %p225 = scmp.ne.s32.totalorder %s211, %s212
    %p226 = scmp.eq.s32.totalorder %s22, 3
    %p227 = por %p225, %p226
    %p229 = scmp.ne.s32.totalorder %s212, %s228
    %p230 = scmp.eq.s32.totalorder %s22, 0
    %p231 = por %p229, %p230
    %s232 = ssub.s32 %s23, %s35
    %s233 = ssub.s32 %s24, %s31
    %s234 = sor.u32 %s232, %s233
    %p235 = scmp.eq.s32.totalorder %s234, 0
    %s237 = sadd.s32 %s236, 1
    %s238 = scalar_select %p235, %s236, %s237
    %p241 = pneg %p235
    %p242 = scmp.eq.s32.totalorder %s16, 3
    %p243 = por %p241, %p242
    %p244 = scmp.ne.s32.totalorder %s236, %s239
    %p245 = scmp.eq.s32.totalorder %s16, 0
    %p246 = por %p244, %p245
    %p247 = scmp.ne.s32.totalorder %s236, %s239
    %p248 = scmp.eq.s32.totalorder %s21, 3
    %p249 = por %p247, %p248
    %p250 = scmp.ne.s32.totalorder %s239, %s240
    %p251 = scmp.eq.s32.totalorder %s21, 0
    %p252 = por %p250, %p251
    %p253 = scmp.ne.s32.totalorder %s239, %s240
    %p254 = scmp.eq.s32.totalorder %s22, 3
    %p255 = por %p253, %p254
    %p257 = scmp.ne.s32.totalorder %s240, %s256
    %p258 = scmp.eq.s32.totalorder %s22, 0
    %p259 = por %p257, %p258
    %s260 = ssub.s32 %s23, %s35
    %s261 = ssub.s32 %s24, %s31
    %s262 = sor.u32 %s260, %s261
    %p263 = scmp.eq.s32.totalorder %s262, 0
    %s265 = sadd.s32 %s264, 1
    %s266 = scalar_select %p263, %s264, %s265
    %p269 = pneg %p263
    %p270 = scmp.eq.s32.totalorder %s16, 3
    %p271 = por %p269, %p270
    %p272 = scmp.ne.s32.totalorder %s264, %s267
    %p273 = scmp.eq.s32.totalorder %s16, 0
    %p274 = por %p272, %p273
    %p275 = scmp.ne.s32.totalorder %s264, %s267
    %p276 = scmp.eq.s32.totalorder %s21, 3
    %p277 = por %p275, %p276
    %p278 = scmp.ne.s32.totalorder %s267, %s268
    %p279 = scmp.eq.s32.totalorder %s21, 0
    %p280 = por %p278, %p279
    %p281 = scmp.ne.s32.totalorder %s267, %s268
    %p282 = scmp.eq.s32.totalorder %s22, 3
    %p283 = por %p281, %p282
    %p285 = scmp.ne.s32.totalorder %s268, %s284
    %p286 = scmp.eq.s32.totalorder %s22, 0
    %p287 = por %p285, %p286
    %p288 = scmp.le.s32.totalorder 1, %s16
    %p289 = scmp.lt.s32.totalorder %s16, 5
    %p290 = pnand %p288, %p289
    %p291 = pneg %p290
    // Predicated region
    $region9: #{attention_block_forward.3} parent=5 // pred_check
      _
    $region10: #{attention_block_forward.3} parent=5 // pred_check_branch
      %293 = sbr.rel (%p290) target = $region12
    $region11: #{attention_block_forward.3} parent=5 // pred_region
      %s294 = ssub.s32 %s16, 1
      // Predicated region
      $region13: #{attention_block_forward.3} parent=11 // pred_check
        %p295 = pneg %p105
      $region14: #{attention_block_forward.3} parent=11 // pred_check_branch
        %297 = sbr.rel (%p295) target = $region16
      $region15: #{attention_block_forward.3} parent=11 // pred_region
        _
      $region16: #{attention_block_forward.3} parent=11 // pred_fallthru
        _
      // Predicated region
      $region17: #{attention_block_forward.3} parent=11 // pred_check
        %p298 = pneg %p126
      $region18: #{attention_block_forward.3} parent=11 // pred_check_branch
        %300 = sbr.rel (%p298) target = $region20
      $region19: #{attention_block_forward.3} parent=11 // pred_region
        _
      $region20: #{attention_block_forward.3} parent=11 // pred_fallthru
        _
      // Predicated region
      $region21: #{attention_block_forward.3} parent=11 // pred_check
        %p301 = pneg %p147
      $region22: #{attention_block_forward.3} parent=11 // pred_check_branch
        %303 = sbr.rel (%p301) target = $region24
      $region23: #{attention_block_forward.3} parent=11 // pred_region
        _
      $region24: #{attention_block_forward.3} parent=11 // pred_fallthru
        _
      // Predicated region
      $region25: #{attention_block_forward.3} parent=11 // pred_check
        %p304 = pneg %p168
      $region26: #{attention_block_forward.3} parent=11 // pred_check_branch
        %306 = sbr.rel (%p304) target = $region28
      $region27: #{attention_block_forward.3} parent=11 // pred_region
        _
      $region28: #{attention_block_forward.3} parent=11 // pred_fallthru
        _
    $region12: #{attention_block_forward.3} parent=5 // pred_fallthru
      _
    %p307 = scmp.lt.s32.totalorder %s16, 4
    // Predicated region
    $region29: #{attention_block_forward.3} parent=5 // pred_check
      %p308 = pneg %p307
    $region30: #{attention_block_forward.3} parent=5 // pred_check_branch
      %310 = sbr.rel (%p308) target = $region32
    $region31: #{attention_block_forward.3} parent=5 // pred_region
      // Predicated region
      $region33: #{attention_block_forward.3} parent=31 // pred_check
        %p311 = pneg %p50
      $region34: #{attention_block_forward.3} parent=31 // pred_check_branch
        %313 = sbr.rel (%p311) target = $region36
      $region35: #{attention_block_forward.3} parent=31 // pred_region
        %p314 = scmp.lt.s32.totalorder %s23, 1
        %s315 = scalar_select %p314, %s23, 1
        %p316 = scmp.lt.s32.totalorder %s24, 1
        %s317 = scalar_select %p316, %s24, 1
        %s318 = smul.addr %s315, 2
        %s319 = sadd.s32 %s317, %s318
        %s320 = smul.addr %s319, 4
        %s321 = scalar_lea.vmem %s0, %s320
      $region36: #{attention_block_forward.3} parent=31 // pred_fallthru
        _
      // Predicated region
      $region37: #{attention_block_forward.3} parent=31 // pred_check
        %p322 = pneg %p78
      $region38: #{attention_block_forward.3} parent=31 // pred_check_branch
        %324 = sbr.rel (%p322) target = $region40
      $region39: #{attention_block_forward.3} parent=31 // pred_region
        %p325 = scmp.lt.s32.totalorder %s23, 1
        %s326 = scalar_select %p325, %s23, 1
        %p327 = scmp.lt.s32.totalorder %s24, 1
        %s328 = scalar_select %p327, %s24, 1
        %s329 = smul.addr %s326, 2
        %s330 = sadd.s32 %s328, %s329
        %s331 = smul.addr %s330, 4
        %s332 = scalar_lea.vmem %s1, %s331
      $region40: #{attention_block_forward.3} parent=31 // pred_fallthru
        _
    $region32: #{attention_block_forward.3} parent=5 // pred_fallthru
      _
    %p333 = scmp.le.s32.totalorder 1, %s16
    %p334 = scmp.lt.s32.totalorder %s16, 5
    %p335 = pnand %p333, %p334
    %p336 = pneg %p335
    // Predicated region
    $region41: #{attention_block_forward.3} parent=5 // pred_check
      _
    $region42: #{attention_block_forward.3} parent=5 // pred_check_branch
      %338 = sbr.rel (%p335) target = $region44
    $region43: #{attention_block_forward.3} parent=5 // pred_region
      %s339 = ssub.s32 %s16, 1
      %p340 = scmp.lt.s32.totalorder %s25, 1
      %s341 = scalar_select %p340, %s25, 1
      %p342 = scmp.lt.s32.totalorder %s26, 1
      %s343 = scalar_select %p342, %s26, 1
      %s344 = smul.addr %s341, 2
      %s345 = sadd.s32 %s343, %s344
      %s346 = smul.addr %s345, 4
      %s347 = scalar_lea.vmem %s0, %s346
      %p348 = pneg %p56
      %p349 = pneg %p53
      %p350 = scmp.lt.s32.totalorder %s25, 1
      %s351 = scalar_select %p350, %s25, 1
      %p352 = scmp.lt.s32.totalorder %s26, 1
      %s353 = scalar_select %p352, %s26, 1
      %s354 = smul.addr %s351, 2
      %s355 = sadd.s32 %s353, %s354
      %s356 = smul.addr %s355, 4
      %s357 = scalar_lea.vmem %s1, %s356
      %p358 = pneg %p84
      %p359 = pneg %p81
      %p360 = pneg %p105
      %p361 = pneg %p102
      %p362 = pneg %p126
      %p363 = pneg %p123
      %p364 = pneg %p147
      %p365 = pneg %p144
      %p366 = pneg %p168
      %p367 = pneg %p165
      %p368 = pneg %p196
      %p369 = pneg %p193
      %p370 = scmp.lt.s32.totalorder %s25, 1
      %s371 = scalar_select %p370, %s25, 1
      %p372 = scmp.lt.s32.totalorder %s26, 1
      %s373 = scalar_select %p372, %s26, 1
      %s374 = smul.addr %s371, 2
      %s375 = sadd.s32 %s373, %s374
      %s376 = smul.addr %s375, 8
      %s377 = scalar_lea.vmem %s6, %s376
      %p378 = pneg %p224
      %p379 = pneg %p221
      %p380 = scmp.lt.s32.totalorder %s25, 1
      %s381 = scalar_select %p380, %s25, 1
      %p382 = scmp.lt.s32.totalorder %s26, 1
      %s383 = scalar_select %p382, %s26, 1
      %s384 = smul.addr %s381, 2
      %s385 = sadd.s32 %s383, %s384
      %s386 = smul.addr %s385, 8
      %s387 = scalar_lea.vmem %s7, %s386
      %p388 = pneg %p252
      %p389 = pneg %p249
      %p390 = scmp.lt.s32.totalorder %s25, 1
      %s391 = scalar_select %p390, %s25, 1
      %p392 = scmp.lt.s32.totalorder %s26, 1
      %s393 = scalar_select %p392, %s26, 1
      %s394 = smul.addr %s391, 2
      %s395 = sadd.s32 %s393, %s394
      %s396 = smul.addr %s395, 8
      %s397 = scalar_lea.vmem %s8, %s396
      %p398 = pneg %p280
      %p399 = pneg %p277
      %p400 = scmp.lt.s32.totalorder %s25, 1
      %s401 = scalar_select %p400, %s25, 1
      %p402 = scmp.lt.s32.totalorder %s26, 1
      %s403 = scalar_select %p402, %s26, 1
      %s404 = smul.addr %s401, 2
      %s405 = sadd.s32 %s403, %s404
      %s406 = smul.addr %s405, 8
      %s407 = scalar_lea.vmem %s9, %s406
      %p408 = scmp.lt.s32.totalorder %s25, 1
      %s409 = scalar_select %p408, %s25, 1
      %p410 = scmp.lt.s32.totalorder %s26, 1
      %s411 = scalar_select %p410, %s26, 1
      %s412 = smul.addr %s409, 2
      %s413 = sadd.s32 %s411, %s412
      %s414 = smul.addr %s413, 4
      %s415 = scalar_lea.vmem %s0, %s414
      %p416 = scmp.lt.s32.totalorder %s25, 1
      %s417 = scalar_select %p416, %s25, 1
      %p418 = scmp.lt.s32.totalorder %s26, 1
      %s419 = scalar_select %p418, %s26, 1
      %s420 = smul.addr %s417, 2
      %s421 = sadd.s32 %s419, %s420
      %s422 = smul.addr %s421, 4
      %s423 = scalar_lea.vmem %s1, %s422
      %p424 = scmp.lt.s32.totalorder %s25, 1
      %s425 = scalar_select %p424, %s25, 1
      %p426 = scmp.lt.s32.totalorder %s26, 1
      %s427 = scalar_select %p426, %s26, 1
      %s428 = smul.addr %s425, 2
      %s429 = sadd.s32 %s427, %s428
      %s430 = smul.addr %s429, 8
      %s431 = scalar_lea.vmem %s6, %s430
      %p432 = scmp.lt.s32.totalorder %s25, 1
      %s433 = scalar_select %p432, %s25, 1
      %p434 = scmp.lt.s32.totalorder %s26, 1
      %s435 = scalar_select %p434, %s26, 1
      %s436 = smul.addr %s433, 2
      %s437 = sadd.s32 %s435, %s436
      %s438 = smul.addr %s437, 8
      %s439 = scalar_lea.vmem %s7, %s438
      %p440 = scmp.lt.s32.totalorder %s25, 1
      %s441 = scalar_select %p440, %s25, 1
      %p442 = scmp.lt.s32.totalorder %s26, 1
      %s443 = scalar_select %p442, %s26, 1
      %s444 = smul.addr %s441, 2
      %s445 = sadd.s32 %s443, %s444
      %s446 = smul.addr %s445, 8
      %s447 = scalar_lea.vmem %s8, %s446
      %p448 = scmp.lt.s32.totalorder %s25, 1
      %s449 = scalar_select %p448, %s25, 1
      %p450 = scmp.lt.s32.totalorder %s26, 1
      %s451 = scalar_select %p450, %s26, 1
      %s452 = smul.addr %s449, 2
      %s453 = sadd.s32 %s451, %s452
      %s454 = smul.addr %s453, 8
      %s455 = scalar_lea.vmem %s9, %s454
      %v456 = vld [vmem:[%s415] sm:$0xf]
      %v457 = vld [vmem:[%s423] sm:$0xf]
      %v458 = vld [vmem:[%s2] sm:$0xff]
      %v459 = vld [vmem:[%s3] sm:$0xff]
      %461 = vset.pattern.permute.xlu0 0
      %462 = vperm.xlu0 %461, %v459
      %v463 = vpop.permute.xlu0 %462
      %vm465 = vcmask 31744
      %v467 = vsel %vm465, %v458, 0
      %vm469 = vcmask 1043456
      %v471 = vsel %vm469, %v456, 0
      %473 = vmatpush.msra.mxu0 0.0
      %474 = vmatpush.msra.mxu0 0.0
      %475 = vmatpush.msra.mxu0 0.0
      %476 = vmatpush.msra.mxu0 0.0
      %477 = vmatpush.msra.mxu0 0.0
      %478 = vmatpush.msra.mxu0 0.0
      %479 = vmatpush.msra.mxu0 0.0
      %480 = vmatpush.msra.mxu0 0.0
      %481 = vmatpush.msra.mxu0 0.0
      %482 = vmatpush.msra.mxu0 0.0
      %483 = vmatpush.msra.mxu0 0.0
      %484 = vmatpush.msra.mxu0 0.0
      %485 = vmatpush.msra.mxu0 0.0
      %486 = vmatpush.msra.mxu0 0.0
      %487 = vmatpush.msra.mxu0 0.0
      %488 = vmatpush.msra.mxu0 %v471
      %489 = vmatmul.f32.gmra.mxu0 %v467
      %v490 = vpop.f32.mrf.mxu0
      %v491 = vadd.f32 %v463, %v490
      %492 = vdwg.mxu0
      %v493 = vld [vmem:[%s4] sm:$0xff]
      %v494 = vld [vmem:[%s5] sm:$0xff]
      %496 = vset.pattern.permute.xlu0 0
      %497 = vperm.xlu0 %496, %v494
      %v498 = vpop.permute.xlu0 %497
      %v501 = vsel %vm465, %v493, 0
      %v504 = vsel %vm469, %v457, 0
      %506 = vmatpush.msra.mxu0 0.0
      %507 = vmatpush.msra.mxu0 0.0
      %508 = vmatpush.msra.mxu0 0.0
      %509 = vmatpush.msra.mxu0 0.0
      %510 = vmatpush.msra.mxu0 0.0
      %511 = vmatpush.msra.mxu0 0.0
      %512 = vmatpush.msra.mxu0 0.0
      %513 = vmatpush.msra.mxu0 0.0
      %514 = vmatpush.msra.mxu0 0.0
      %515 = vmatpush.msra.mxu0 0.0
      %516 = vmatpush.msra.mxu0 0.0
      %517 = vmatpush.msra.mxu0 0.0
      %518 = vmatpush.msra.mxu0 0.0
      %519 = vmatpush.msra.mxu0 0.0
      %520 = vmatpush.msra.mxu0 0.0
      %521 = vmatpush.msra.mxu0 %v504
      %522 = vmatmul.f32.gmra.mxu0 %v501
      %v523 = vpop.f32.mrf.mxu0
      %v524 = vadd.f32 %v498, %v523
      %525 = vdwg.mxu0
      %526 = vadd.xlane.f32.xlu0 %v491
      %v527 = vpop.xlane.xlu0 %526
      %vm528 = vcmask 7168
      %529 = vst.msk [vmem:[%s431] sm:$0xff] %vm528, %v527
      %v530 = vmul.f32 %v491, %v491
      %531 = vadd.xlane.f32.xlu0 %v530
      %v532 = vpop.xlane.xlu0 %531
      %533 = vst.msk [vmem:[%s439] sm:$0xff] %vm528, %v532
      %534 = vadd.xlane.f32.xlu0 %v524
      %v535 = vpop.xlane.xlu0 %534
      %536 = vst.msk [vmem:[%s447] sm:$0xff] %vm528, %v535
      %v537 = vmul.f32 %v524, %v524
      %538 = vadd.xlane.f32.xlu0 %v537
      %v539 = vpop.xlane.xlu0 %538
      %540 = vst.msk [vmem:[%s455] sm:$0xff] %vm528, %v539
      %p541 = scmp.lt.s32.totalorder %s25, 1
      %s542 = scalar_select %p541, %s25, 1
      %p543 = scmp.lt.s32.totalorder %s26, 1
      %s544 = scalar_select %p543, %s26, 1
      %s545 = smul.addr %s542, 2
      %s546 = sadd.s32 %s544, %s545
      %s547 = smul.addr %s546, 8
      %s548 = scalar_lea.vmem %s6, %s547
      %p549 = scmp.lt.s32.totalorder %s25, 1
      %s550 = scalar_select %p549, %s25, 1
      %p551 = scmp.lt.s32.totalorder %s26, 1
      %s552 = scalar_select %p551, %s26, 1
      %s553 = smul.addr %s550, 2
      %s554 = sadd.s32 %s552, %s553
      %s555 = smul.addr %s554, 8
      %s556 = scalar_lea.vmem %s7, %s555
      %p557 = scmp.lt.s32.totalorder %s25, 1
      %s558 = scalar_select %p557, %s25, 1
      %p559 = scmp.lt.s32.totalorder %s26, 1
      %s560 = scalar_select %p559, %s26, 1
      %s561 = smul.addr %s558, 2
      %s562 = sadd.s32 %s560, %s561
      %s563 = smul.addr %s562, 8
      %s564 = scalar_lea.vmem %s8, %s563
      %p565 = scmp.lt.s32.totalorder %s25, 1
      %s566 = scalar_select %p565, %s25, 1
      %p567 = scmp.lt.s32.totalorder %s26, 1
      %s568 = scalar_select %p567, %s26, 1
      %s569 = smul.addr %s566, 2
      %s570 = sadd.s32 %s568, %s569
      %s571 = smul.addr %s570, 8
      %s572 = scalar_lea.vmem %s9, %s571
      // Predicated region
      $region45: #{attention_block_forward.3} parent=43 // pred_check
        %p573 = pneg %p193
      $region46: #{attention_block_forward.3} parent=43 // pred_check_branch
        %575 = sbr.rel (%p573) target = $region48
      $region47: #{attention_block_forward.3} parent=43 // pred_region
        _
      $region48: #{attention_block_forward.3} parent=43 // pred_fallthru
        _
      // Predicated region
      $region49: #{attention_block_forward.3} parent=43 // pred_check
        %p576 = pneg %p221
      $region50: #{attention_block_forward.3} parent=43 // pred_check_branch
        %578 = sbr.rel (%p576) target = $region52
      $region51: #{attention_block_forward.3} parent=43 // pred_region
        _
      $region52: #{attention_block_forward.3} parent=43 // pred_fallthru
        _
      // Predicated region
      $region53: #{attention_block_forward.3} parent=43 // pred_check
        %p579 = pneg %p249
      $region54: #{attention_block_forward.3} parent=43 // pred_check_branch
        %581 = sbr.rel (%p579) target = $region56
      $region55: #{attention_block_forward.3} parent=43 // pred_region
        _
      $region56: #{attention_block_forward.3} parent=43 // pred_fallthru
        _
      // Predicated region
      $region57: #{attention_block_forward.3} parent=43 // pred_check
        %p582 = pneg %p277
      $region58: #{attention_block_forward.3} parent=43 // pred_check_branch
        %584 = sbr.rel (%p582) target = $region60
      $region59: #{attention_block_forward.3} parent=43 // pred_region
        _
      $region60: #{attention_block_forward.3} parent=43 // pred_fallthru
        _
    $region44: #{attention_block_forward.3} parent=5 // pred_fallthru
      _
    %p585 = scmp.le.s32.totalorder 2, %s16
    // Predicated region
    $region61: #{attention_block_forward.3} parent=5 // pred_check
      %p586 = pneg %p585
    $region62: #{attention_block_forward.3} parent=5 // pred_check_branch
      %588 = sbr.rel (%p586) target = $region64
    $region63: #{attention_block_forward.3} parent=5 // pred_region
      %s589 = ssub.s32 %s16, 2
      // Predicated region
      $region65: #{attention_block_forward.3} parent=63 // pred_check
        %p590 = pneg %p199
      $region66: #{attention_block_forward.3} parent=63 // pred_check_branch
        %592 = sbr.rel (%p590) target = $region68
      $region67: #{attention_block_forward.3} parent=63 // pred_region
        %p593 = scmp.lt.s32.totalorder %s27, 1
        %s594 = scalar_select %p593, %s27, 1
        %p595 = scmp.lt.s32.totalorder %s28, 1
        %s596 = scalar_select %p595, %s28, 1
        %s597 = smul.addr %s594, 2
        %s598 = sadd.s32 %s596, %s597
        %s599 = smul.addr %s598, 8
        %s600 = scalar_lea.vmem %s6, %s599
      $region68: #{attention_block_forward.3} parent=63 // pred_fallthru
        _
      // Predicated region
      $region69: #{attention_block_forward.3} parent=63 // pred_check
        %p601 = pneg %p227
      $region70: #{attention_block_forward.3} parent=63 // pred_check_branch
        %603 = sbr.rel (%p601) target = $region72
      $region71: #{attention_block_forward.3} parent=63 // pred_region
        %p604 = scmp.lt.s32.totalorder %s27, 1
        %s605 = scalar_select %p604, %s27, 1
        %p606 = scmp.lt.s32.totalorder %s28, 1
        %s607 = scalar_select %p606, %s28, 1
        %s608 = smul.addr %s605, 2
        %s609 = sadd.s32 %s607, %s608
        %s610 = smul.addr %s609, 8
        %s611 = scalar_lea.vmem %s7, %s610
      $region72: #{attention_block_forward.3} parent=63 // pred_fallthru
        _
      // Predicated region
      $region73: #{attention_block_forward.3} parent=63 // pred_check
        %p612 = pneg %p255
      $region74: #{attention_block_forward.3} parent=63 // pred_check_branch
        %614 = sbr.rel (%p612) target = $region76
      $region75: #{attention_block_forward.3} parent=63 // pred_region
        %p615 = scmp.lt.s32.totalorder %s27, 1
        %s616 = scalar_select %p615, %s27, 1
        %p617 = scmp.lt.s32.totalorder %s28, 1
        %s618 = scalar_select %p617, %s28, 1
        %s619 = smul.addr %s616, 2
        %s620 = sadd.s32 %s618, %s619
        %s621 = smul.addr %s620, 8
        %s622 = scalar_lea.vmem %s8, %s621
      $region76: #{attention_block_forward.3} parent=63 // pred_fallthru
        _
      // Predicated region
      $region77: #{attention_block_forward.3} parent=63 // pred_check
        %p623 = pneg %p283
      $region78: #{attention_block_forward.3} parent=63 // pred_check_branch
        %625 = sbr.rel (%p623) target = $region80
      $region79: #{attention_block_forward.3} parent=63 // pred_region
        %p626 = scmp.lt.s32.totalorder %s27, 1
        %s627 = scalar_select %p626, %s27, 1
        %p628 = scmp.lt.s32.totalorder %s28, 1
        %s629 = scalar_select %p628, %s28, 1
        %s630 = smul.addr %s627, 2
        %s631 = sadd.s32 %s629, %s630
        %s632 = smul.addr %s631, 8
        %s633 = scalar_lea.vmem %s9, %s632
      $region80: #{attention_block_forward.3} parent=63 // pred_fallthru
        _
    $region64: #{attention_block_forward.3} parent=5 // pred_fallthru
      _
  $region6: #{attention_block_forward.3} parent=0 // loop_footer
    %s20 = sadd.s32 1, %s16
  $region7: #{attention_block_forward.3} parent=0 // loop_footer_branch
    %15 = sbr.rel target = $region3
  $region8: #{attention_block_forward.3} parent=0 // loop_exit
    _

// kernel: attention_block_forward.4
$region0: #{attention_block_forward.4}
  #allocation0 [shape = 'u32[]', space=smem, size = 0x4, offset = 0x4, fixed_abs, tag = 'smem constant byte address 0x4 - core index']
  #allocation1 [shape = 'u32[72,128]{1,0:T(1,128)}', space=vmem, size = 0x9000, scoped, tag = 'internal scratch']
  #allocation2 [shape = 'f32[1,1]{1,0:T(1,128)S(1)}', space=vmem, size = 0x200, scoped, tag = 'scoped memory for attention_block_forward.4']
  %s0 = inlined_call_operand.vmem [shape: f32[2,4,256], index: 0, kind: input, shape index: {}]
  %s1 = inlined_call_operand.vmem [shape: f32[2,4,256], index: 1, kind: input, shape index: {}]
  %s2 = inlined_call_operand.vmem [shape: f32[8,4], index: 2, kind: input, shape index: {}]
  %s3 = inlined_call_operand.vmem [shape: f32[8,1], index: 3, kind: input, shape index: {}]
  %s4 = inlined_call_operand.vmem [shape: f32[8,4], index: 4, kind: input, shape index: {}]
  %s5 = inlined_call_operand.vmem [shape: f32[8,1], index: 5, kind: input, shape index: {}]
  %s6 = inlined_call_operand.vmem [shape: f32[8,8], index: 6, kind: input, shape index: {}]
  %s7 = inlined_call_operand.<no memory space> [shape: f32[1,1], index: 7, kind: input, shape index: {}]
  %s8 = inlined_call_operand.vmem [shape: f32[2,1,256], index: 8, kind: output, shape index: {0}]
  %s9 = inlined_call_operand.vmem [shape: f32[2,2,1,1], index: 9, kind: output, shape index: {1}]
  %s10 = inlined_call_operand.vmem [shape: f32[2,2,1,1], index: 10, kind: output, shape index: {2}]
  %11 = xla_tuple %s8, %s9, %s10
  %s12 = sld [smem:[#allocation0]]
  $region81: #{attention_block_forward.4} parent=0
    _
  %s14 = ssub.s32 1, %s12
  %s15 = scalar_select 0, %s14, %s12
  %v16 = vstv %s7
  %17 = vst [vmem:[#allocation2] sm:$0x1] %v16
  loop: start=0, step=1, limit=6
  $region2: #{attention_block_forward.4} parent=0 // loop_pre_header
    _
  $region3: #{attention_block_forward.4} parent=0 // loop_header
    %s19 = sphi 0, %s23
    %p20 = scmp.ge.s32.totalorder %s19, 6
    %s26 = sphi 0, %s38
    %s27 = sphi 0, %s34
    %s28 = sphi 0, %s26
    %s29 = sphi 0, %s27
    %s30 = sphi 0, %s28
    %s31 = sphi 0, %s29
    %s43 = sphi 0, %s45
    %s46 = sphi 0, %s43
    %s47 = sphi 0, %s46
    %s63 = sphi 0, %s47
    %s71 = sphi 0, %s73
    %s74 = sphi 0, %s71
    %s75 = sphi 0, %s74
    %s91 = sphi 0, %s75
    %s95 = sphi 0, %s95
    %s97 = sphi 0, %s95
    %s98 = sphi 0, %s97
    %s112 = sphi 0, %s98
    %s116 = sphi 0, %s116
    %s118 = sphi 0, %s116
    %s119 = sphi 0, %s118
    %s133 = sphi 0, %s119
    %s137 = sphi 0, %s137
    %s139 = sphi 0, %s137
    %s140 = sphi 0, %s139
    %s154 = sphi 0, %s140
    %s158 = sphi 0, %s158
    %s160 = sphi 0, %s158
    %s161 = sphi 0, %s160
    %s175 = sphi 0, %s161
    %s179 = sphi 0, %s179
    %s181 = sphi 0, %s179
    %s182 = sphi 0, %s181
    %s196 = sphi 0, %s182
    %s200 = sphi 0, %s200
    %s202 = sphi 0, %s200
    %s203 = sphi 0, %s202
    %s217 = sphi 0, %s203
    %s225 = sphi 0, %s227
    %s228 = sphi 0, %s225
    %s229 = sphi 0, %s228
    %s245 = sphi 0, %s229
    %s253 = sphi 0, %s255
    %s256 = sphi 0, %s253
    %s257 = sphi 0, %s256
    %s273 = sphi 0, %s257
    %s281 = sphi 0, %s283
    %s284 = sphi 0, %s281
    %s285 = sphi 0, %s284
    %s301 = sphi 0, %s285
  $region4: #{attention_block_forward.4} parent=0 // loop_header_branch
    %22 = sbr.rel (%p20) target = $region8
  $region5: #{attention_block_forward.4} parent=0 // loop_body
    %s24 = ssub.s32 %s19, 1
    %s25 = ssub.s32 %s19, 2
    %s32 = sadd.s32 1, %s27
    %p33 = scmp.ge.s32.totalorder %s32, 2
    %s34 = scalar_select %p33, 0, %s32
    %s35 = sadd.s32 1, %s26
    %s36 = scalar_select %p33, %s35, %s26
    %p37 = scmp.ge.s32.totalorder %s36, 2
    %s38 = scalar_select %p37, 0, %s36
    %s39 = ssub.s32 %s26, %s38
    %s40 = ssub.s32 %s27, %s34
    %s41 = sor.u32 %s39, %s40
    %p42 = scmp.eq.s32.totalorder %s41, 0
    %s44 = sadd.s32 %s43, 1
    %s45 = scalar_select %p42, %s43, %s44
    %p48 = pneg %p42
    %p49 = scmp.eq.s32.totalorder %s19, 3
    %p50 = por %p48, %p49
    %p51 = scmp.ne.s32.totalorder %s43, %s46
    %p52 = scmp.eq.s32.totalorder %s19, 0
    %p53 = por %p51, %p52
    %p54 = scmp.ne.s32.totalorder %s43, %s46
    %p55 = scmp.eq.s32.totalorder %s24, 3
    %p56 = por %p54, %p55
    %p57 = scmp.ne.s32.totalorder %s46, %s47
    %p58 = scmp.eq.s32.totalorder %s24, 0
    %p59 = por %p57, %p58
    %p60 = scmp.ne.s32.totalorder %s46, %s47
    %p61 = scmp.eq.s32.totalorder %s25, 3
    %p62 = por %p60, %p61
    %p64 = scmp.ne.s32.totalorder %s47, %s63
    %p65 = scmp.eq.s32.totalorder %s25, 0
    %p66 = por %p64, %p65
    %s67 = ssub.s32 %s26, %s38
    %s68 = ssub.s32 %s27, %s34
    %s69 = sor.u32 %s67, %s68
    %p70 = scmp.eq.s32.totalorder %s69, 0
    %s72 = sadd.s32 %s71, 1
    %s73 = scalar_select %p70, %s71, %s72
    %p76 = pneg %p70
    %p77 = scmp.eq.s32.totalorder %s19, 3
    %p78 = por %p76, %p77
    %p79 = scmp.ne.s32.totalorder %s71, %s74
    %p80 = scmp.eq.s32.totalorder %s19, 0
    %p81 = por %p79, %p80
    %p82 = scmp.ne.s32.totalorder %s71, %s74
    %p83 = scmp.eq.s32.totalorder %s24, 3
    %p84 = por %p82, %p83
    %p85 = scmp.ne.s32.totalorder %s74, %s75
    %p86 = scmp.eq.s32.totalorder %s24, 0
    %p87 = por %p85, %p86
    %p88 = scmp.ne.s32.totalorder %s74, %s75
    %p89 = scmp.eq.s32.totalorder %s25, 3
    %p90 = por %p88, %p89
    %p92 = scmp.ne.s32.totalorder %s75, %s91
    %p93 = scmp.eq.s32.totalorder %s25, 0
    %p94 = por %p92, %p93
    %s96 = sadd.s32 %s95, 1
    %p99 = scmp.eq.s32.totalorder %s19, 3
    %p100 = scmp.ne.s32.totalorder %s95, %s97
    %p101 = scmp.eq.s32.totalorder %s19, 0
    %p102 = por %p100, %p101
    %p103 = scmp.ne.s32.totalorder %s95, %s97
    %p104 = scmp.eq.s32.totalorder %s24, 3
    %p105 = por %p103, %p104
    %p106 = scmp.ne.s32.totalorder %s97, %s98
    %p107 = scmp.eq.s32.totalorder %s24, 0
    %p108 = por %p106, %p107
    %p109 = scmp.ne.s32.totalorder %s97, %s98
    %p110 = scmp.eq.s32.totalorder %s25, 3
    %p111 = por %p109, %p110
    %p113 = scmp.ne.s32.totalorder %s98, %s112
    %p114 = scmp.eq.s32.totalorder %s25, 0
    %p115 = por %p113, %p114
    %s117 = sadd.s32 %s116, 1
    %p120 = scmp.eq.s32.totalorder %s19, 3
    %p121 = scmp.ne.s32.totalorder %s116, %s118
    %p122 = scmp.eq.s32.totalorder %s19, 0
    %p123 = por %p121, %p122
    %p124 = scmp.ne.s32.totalorder %s116, %s118
    %p125 = scmp.eq.s32.totalorder %s24, 3
    %p126 = por %p124, %p125
    %p127 = scmp.ne.s32.totalorder %s118, %s119
    %p128 = scmp.eq.s32.totalorder %s24, 0
    %p129 = por %p127, %p128
    %p130 = scmp.ne.s32.totalorder %s118, %s119
    %p131 = scmp.eq.s32.totalorder %s25, 3
    %p132 = por %p130, %p131
    %p134 = scmp.ne.s32.totalorder %s119, %s133
    %p135 = scmp.eq.s32.totalorder %s25, 0
    %p136 = por %p134, %p135
    %s138 = sadd.s32 %s137, 1
    %p141 = scmp.eq.s32.totalorder %s19, 3
    %p142 = scmp.ne.s32.totalorder %s137, %s139
    %p143 = scmp.eq.s32.totalorder %s19, 0
    %p144 = por %p142, %p143
    %p145 = scmp.ne.s32.totalorder %s137, %s139
    %p146 = scmp.eq.s32.totalorder %s24, 3
    %p147 = por %p145, %p146
    %p148 = scmp.ne.s32.totalorder %s139, %s140
    %p149 = scmp.eq.s32.totalorder %s24, 0
    %p150 = por %p148, %p149
    %p151 = scmp.ne.s32.totalorder %s139, %s140
    %p152 = scmp.eq.s32.totalorder %s25, 3
    %p153 = por %p151, %p152
    %p155 = scmp.ne.s32.totalorder %s140, %s154
    %p156 = scmp.eq.s32.totalorder %s25, 0
    %p157 = por %p155, %p156
    %s159 = sadd.s32 %s158, 1
    %p162 = scmp.eq.s32.totalorder %s19, 3
    %p163 = scmp.ne.s32.totalorder %s158, %s160
    %p164 = scmp.eq.s32.totalorder %s19, 0
    %p165 = por %p163, %p164
    %p166 = scmp.ne.s32.totalorder %s158, %s160
    %p167 = scmp.eq.s32.totalorder %s24, 3
    %p168 = por %p166, %p167
    %p169 = scmp.ne.s32.totalorder %s160, %s161
    %p170 = scmp.eq.s32.totalorder %s24, 0
    %p171 = por %p169, %p170
    %p172 = scmp.ne.s32.totalorder %s160, %s161
    %p173 = scmp.eq.s32.totalorder %s25, 3
    %p174 = por %p172, %p173
    %p176 = scmp.ne.s32.totalorder %s161, %s175
    %p177 = scmp.eq.s32.totalorder %s25, 0
    %p178 = por %p176, %p177
    %s180 = sadd.s32 %s179, 1
    %p183 = scmp.eq.s32.totalorder %s19, 3
    %p184 = scmp.ne.s32.totalorder %s179, %s181
    %p185 = scmp.eq.s32.totalorder %s19, 0
    %p186 = por %p184, %p185
    %p187 = scmp.ne.s32.totalorder %s179, %s181
    %p188 = scmp.eq.s32.totalorder %s24, 3
    %p189 = por %p187, %p188
    %p190 = scmp.ne.s32.totalorder %s181, %s182
    %p191 = scmp.eq.s32.totalorder %s24, 0
    %p192 = por %p190, %p191
    %p193 = scmp.ne.s32.totalorder %s181, %s182
    %p194 = scmp.eq.s32.totalorder %s25, 3
    %p195 = por %p193, %p194
    %p197 = scmp.ne.s32.totalorder %s182, %s196
    %p198 = scmp.eq.s32.totalorder %s25, 0
    %p199 = por %p197, %p198
    %s201 = sadd.s32 %s200, 1
    %p204 = scmp.eq.s32.totalorder %s19, 3
    %p205 = scmp.ne.s32.totalorder %s200, %s202
    %p206 = scmp.eq.s32.totalorder %s19, 0
    %p207 = por %p205, %p206
    %p208 = scmp.ne.s32.totalorder %s200, %s202
    %p209 = scmp.eq.s32.totalorder %s24, 3
    %p210 = por %p208, %p209
    %p211 = scmp.ne.s32.totalorder %s202, %s203
    %p212 = scmp.eq.s32.totalorder %s24, 0
    %p213 = por %p211, %p212
    %p214 = scmp.ne.s32.totalorder %s202, %s203
    %p215 = scmp.eq.s32.totalorder %s25, 3
    %p216 = por %p214, %p215
    %p218 = scmp.ne.s32.totalorder %s203, %s217
    %p219 = scmp.eq.s32.totalorder %s25, 0
    %p220 = por %p218, %p219
    %s221 = ssub.s32 %s26, %s38
    %s222 = ssub.s32 %s27, %s34
    %s223 = sor.u32 %s221, %s222
    %p224 = scmp.eq.s32.totalorder %s223, 0
    %s226 = sadd.s32 %s225, 1
    %s227 = scalar_select %p224, %s225, %s226
    %p230 = pneg %p224
    %p231 = scmp.eq.s32.totalorder %s19, 3
    %p232 = por %p230, %p231
    %p233 = scmp.ne.s32.totalorder %s225, %s228
    %p234 = scmp.eq.s32.totalorder %s19, 0
    %p235 = por %p233, %p234
    %p236 = scmp.ne.s32.totalorder %s225, %s228
    %p237 = scmp.eq.s32.totalorder %s24, 3
    %p238 = por %p236, %p237
    %p239 = scmp.ne.s32.totalorder %s228, %s229
    %p240 = scmp.eq.s32.totalorder %s24, 0
    %p241 = por %p239, %p240
    %p242 = scmp.ne.s32.totalorder %s228, %s229
    %p243 = scmp.eq.s32.totalorder %s25, 3
    %p244 = por %p242, %p243
    %p246 = scmp.ne.s32.totalorder %s229, %s245
    %p247 = scmp.eq.s32.totalorder %s25, 0
    %p248 = por %p246, %p247
    %s249 = ssub.s32 %s26, %s38
    %s250 = ssub.s32 %s27, %s34
    %s251 = sor.u32 %s249, %s250
    %p252 = scmp.eq.s32.totalorder %s251, 0
    %s254 = sadd.s32 %s253, 1
    %s255 = scalar_select %p252, %s253, %s254
    %p258 = pneg %p252
    %p259 = scmp.eq.s32.totalorder %s19, 3
    %p260 = por %p258, %p259
    %p261 = scmp.ne.s32.totalorder %s253, %s256
    %p262 = scmp.eq.s32.totalorder %s19, 0
    %p263 = por %p261, %p262
    %p264 = scmp.ne.s32.totalorder %s253, %s256
    %p265 = scmp.eq.s32.totalorder %s24, 3
    %p266 = por %p264, %p265
    %p267 = scmp.ne.s32.totalorder %s256, %s257
    %p268 = scmp.eq.s32.totalorder %s24, 0
    %p269 = por %p267, %p268
    %p270 = scmp.ne.s32.totalorder %s256, %s257
    %p271 = scmp.eq.s32.totalorder %s25, 3
    %p272 = por %p270, %p271
    %p274 = scmp.ne.s32.totalorder %s257, %s273
    %p275 = scmp.eq.s32.totalorder %s25, 0
    %p276 = por %p274, %p275
    %s277 = ssub.s32 %s26, %s38
    %s278 = ssub.s32 %s27, %s34
    %s279 = sor.u32 %s277, %s278
    %p280 = scmp.eq.s32.totalorder %s279, 0
    %s282 = sadd.s32 %s281, 1
    %s283 = scalar_select %p280, %s281, %s282
    %p286 = pneg %p280
    %p287 = scmp.eq.s32.totalorder %s19, 3
    %p288 = por %p286, %p287
    %p289 = scmp.ne.s32.totalorder %s281, %s284
    %p290 = scmp.eq.s32.totalorder %s19, 0
    %p291 = por %p289, %p290
    %p292 = scmp.ne.s32.totalorder %s281, %s284
    %p293 = scmp.eq.s32.totalorder %s24, 3
    %p294 = por %p292, %p293
    %p295 = scmp.ne.s32.totalorder %s284, %s285
    %p296 = scmp.eq.s32.totalorder %s24, 0
    %p297 = por %p295, %p296
    %p298 = scmp.ne.s32.totalorder %s284, %s285
    %p299 = scmp.eq.s32.totalorder %s25, 3
    %p300 = por %p298, %p299
    %p302 = scmp.ne.s32.totalorder %s285, %s301
    %p303 = scmp.eq.s32.totalorder %s25, 0
    %p304 = por %p302, %p303
    %p305 = scmp.le.s32.totalorder 1, %s19
    %p306 = scmp.lt.s32.totalorder %s19, 5
    %p307 = pnand %p305, %p306
    %p308 = pneg %p307
    // Predicated region
    $region9: #{attention_block_forward.4} parent=5 // pred_check
      _
    $region10: #{attention_block_forward.4} parent=5 // pred_check_branch
      %310 = sbr.rel (%p307) target = $region12
    $region11: #{attention_block_forward.4} parent=5 // pred_region
      %s311 = ssub.s32 %s19, 1
      // Predicated region
      $region13: #{attention_block_forward.4} parent=11 // pred_check
        %p312 = pneg %p108
      $region14: #{attention_block_forward.4} parent=11 // pred_check_branch
        %314 = sbr.rel (%p312) target = $region16
      $region15: #{attention_block_forward.4} parent=11 // pred_region
        _
      $region16: #{attention_block_forward.4} parent=11 // pred_fallthru
        _
      // Predicated region
      $region17: #{attention_block_forward.4} parent=11 // pred_check
        %p315 = pneg %p129
      $region18: #{attention_block_forward.4} parent=11 // pred_check_branch
        %317 = sbr.rel (%p315) target = $region20
      $region19: #{attention_block_forward.4} parent=11 // pred_region
        _
      $region20: #{attention_block_forward.4} parent=11 // pred_fallthru
        _
      // Predicated region
      $region21: #{attention_block_forward.4} parent=11 // pred_check
        %p318 = pneg %p150
      $region22: #{attention_block_forward.4} parent=11 // pred_check_branch
        %320 = sbr.rel (%p318) target = $region24
      $region23: #{attention_block_forward.4} parent=11 // pred_region
        _
      $region24: #{attention_block_forward.4} parent=11 // pred_fallthru
        _
      // Predicated region
      $region25: #{attention_block_forward.4} parent=11 // pred_check
        %p321 = pneg %p171
      $region26: #{attention_block_forward.4} parent=11 // pred_check_branch
        %323 = sbr.rel (%p321) target = $region28
      $region27: #{attention_block_forward.4} parent=11 // pred_region
        _
      $region28: #{attention_block_forward.4} parent=11 // pred_fallthru
        _
      // Predicated region
      $region29: #{attention_block_forward.4} parent=11 // pred_check
        %p324 = pneg %p192
      $region30: #{attention_block_forward.4} parent=11 // pred_check_branch
        %326 = sbr.rel (%p324) target = $region32
      $region31: #{attention_block_forward.4} parent=11 // pred_region
        _
      $region32: #{attention_block_forward.4} parent=11 // pred_fallthru
        _
      // Predicated region
      $region33: #{attention_block_forward.4} parent=11 // pred_check
        %p327 = pneg %p213
      $region34: #{attention_block_forward.4} parent=11 // pred_check_branch
        %329 = sbr.rel (%p327) target = $region36
      $region35: #{attention_block_forward.4} parent=11 // pred_region
        _
      $region36: #{attention_block_forward.4} parent=11 // pred_fallthru
        _
    $region12: #{attention_block_forward.4} parent=5 // pred_fallthru
      _
    %p330 = scmp.lt.s32.totalorder %s19, 4
    // Predicated region
    $region37: #{attention_block_forward.4} parent=5 // pred_check
      %p331 = pneg %p330
    $region38: #{attention_block_forward.4} parent=5 // pred_check_branch
      %333 = sbr.rel (%p331) target = $region40
    $region39: #{attention_block_forward.4} parent=5 // pred_region
      // Predicated region
      $region41: #{attention_block_forward.4} parent=39 // pred_check
        %p334 = pneg %p53
      $region42: #{attention_block_forward.4} parent=39 // pred_check_branch
        %336 = sbr.rel (%p334) target = $region44
      $region43: #{attention_block_forward.4} parent=39 // pred_region
        %p337 = scmp.lt.s32.totalorder %s26, 1
        %s338 = scalar_select %p337, %s26, 1
        %p339 = scmp.lt.s32.totalorder %s27, 1
        %s340 = scalar_select %p339, %s27, 1
        %s341 = smul.addr %s338, 2
        %s342 = sadd.s32 %s340, %s341
        %s343 = smul.addr %s342, 4
        %s344 = scalar_lea.vmem %s0, %s343
      $region44: #{attention_block_forward.4} parent=39 // pred_fallthru
        _
      // Predicated region
      $region45: #{attention_block_forward.4} parent=39 // pred_check
        %p345 = pneg %p81
      $region46: #{attention_block_forward.4} parent=39 // pred_check_branch
        %347 = sbr.rel (%p345) target = $region48
      $region47: #{attention_block_forward.4} parent=39 // pred_region
        %p348 = scmp.lt.s32.totalorder %s26, 1
        %s349 = scalar_select %p348, %s26, 1
        %p350 = scmp.lt.s32.totalorder %s27, 1
        %s351 = scalar_select %p350, %s27, 1
        %s352 = smul.addr %s349, 2
        %s353 = sadd.s32 %s351, %s352
        %s354 = smul.addr %s353, 4
        %s355 = scalar_lea.vmem %s1, %s354
      $region48: #{attention_block_forward.4} parent=39 // pred_fallthru
        _
    $region40: #{attention_block_forward.4} parent=5 // pred_fallthru
      _
    %p356 = scmp.le.s32.totalorder 1, %s19
    %p357 = scmp.lt.s32.totalorder %s19, 5
    %p358 = pnand %p356, %p357
    %p359 = pneg %p358
    // Predicated region
    $region49: #{attention_block_forward.4} parent=5 // pred_check
      _
    $region50: #{attention_block_forward.4} parent=5 // pred_check_branch
      %361 = sbr.rel (%p358) target = $region52
    $region51: #{attention_block_forward.4} parent=5 // pred_region
      %s362 = ssub.s32 %s19, 1
      %p363 = scmp.lt.s32.totalorder %s28, 1
      %s364 = scalar_select %p363, %s28, 1
      %p365 = scmp.lt.s32.totalorder %s29, 1
      %s366 = scalar_select %p365, %s29, 1
      %s367 = smul.addr %s364, 2
      %s368 = sadd.s32 %s366, %s367
      %s369 = smul.addr %s368, 4
      %s370 = scalar_lea.vmem %s0, %s369
      %p371 = pneg %p59
      %p372 = pneg %p56
      %p373 = scmp.lt.s32.totalorder %s28, 1
      %s374 = scalar_select %p373, %s28, 1
      %p375 = scmp.lt.s32.totalorder %s29, 1
      %s376 = scalar_select %p375, %s29, 1
      %s377 = smul.addr %s374, 2
      %s378 = sadd.s32 %s376, %s377
      %s379 = smul.addr %s378, 4
      %s380 = scalar_lea.vmem %s1, %s379
      %p381 = pneg %p87
      %p382 = pneg %p84
      %p383 = pneg %p108
      %p384 = pneg %p105
      %p385 = pneg %p129
      %p386 = pneg %p126
      %p387 = pneg %p150
      %p388 = pneg %p147
      %p389 = pneg %p171
      %p390 = pneg %p168
      %p391 = pneg %p192
      %p392 = pneg %p189
      %p393 = pneg %p213
      %p394 = pneg %p210
      %p395 = pneg %p241
      %p396 = pneg %p238
      %p397 = scmp.lt.s32.totalorder %s28, 1
      %s398 = scalar_select %p397, %s28, 1
      %p399 = scmp.lt.s32.totalorder %s29, 1
      %s400 = scalar_select %p399, %s29, 1
      %s401 = smul.addr %s398, 2
      %s402 = sadd.s32 %s400, %s401
      %s403 = scalar_lea.vmem %s8, %s402
      %p404 = pneg %p269
      %p405 = pneg %p266
      %p406 = scmp.lt.s32.totalorder %s28, 1
      %s407 = scalar_select %p406, %s28, 1
      %p408 = scmp.lt.s32.totalorder %s29, 1
      %s409 = scalar_select %p408, %s29, 1
      %s410 = smul.addr %s407, 2
      %s411 = sadd.s32 %s409, %s410
      %s412 = scalar_lea.vmem %s9, %s411
      %p413 = pneg %p297
      %p414 = pneg %p294
      %p415 = scmp.lt.s32.totalorder %s28, 1
      %s416 = scalar_select %p415, %s28, 1
      %p417 = scmp.lt.s32.totalorder %s29, 1
      %s418 = scalar_select %p417, %s29, 1
      %s419 = smul.addr %s416, 2
      %s420 = sadd.s32 %s418, %s419
      %s421 = scalar_lea.vmem %s10, %s420
      %p422 = scmp.lt.s32.totalorder %s28, 1
      %s423 = scalar_select %p422, %s28, 1
      %p424 = scmp.lt.s32.totalorder %s29, 1
      %s425 = scalar_select %p424, %s29, 1
      %s426 = smul.addr %s423, 2
      %s427 = sadd.s32 %s425, %s426
      %s428 = smul.addr %s427, 4
      %s429 = scalar_lea.vmem %s0, %s428
      %p430 = scmp.lt.s32.totalorder %s28, 1
      %s431 = scalar_select %p430, %s28, 1
      %p432 = scmp.lt.s32.totalorder %s29, 1
      %s433 = scalar_select %p432, %s29, 1
      %s434 = smul.addr %s431, 2
      %s435 = sadd.s32 %s433, %s434
      %s436 = smul.addr %s435, 4
      %s437 = scalar_lea.vmem %s1, %s436
      %p438 = scmp.lt.s32.totalorder %s28, 1
      %s439 = scalar_select %p438, %s28, 1
      %p440 = scmp.lt.s32.totalorder %s29, 1
      %s441 = scalar_select %p440, %s29, 1
      %s442 = smul.addr %s439, 2
      %s443 = sadd.s32 %s441, %s442
      %s444 = scalar_lea.vmem %s8, %s443
      %p445 = scmp.lt.s32.totalorder %s28, 1
      %s446 = scalar_select %p445, %s28, 1
      %p447 = scmp.lt.s32.totalorder %s29, 1
      %s448 = scalar_select %p447, %s29, 1
      %s449 = smul.addr %s446, 2
      %s450 = sadd.s32 %s448, %s449
      %s451 = scalar_lea.vmem %s9, %s450
      %p452 = scmp.lt.s32.totalorder %s28, 1
      %s453 = scalar_select %p452, %s28, 1
      %p454 = scmp.lt.s32.totalorder %s29, 1
      %s455 = scalar_select %p454, %s29, 1
      %s456 = smul.addr %s453, 2
      %s457 = sadd.s32 %s455, %s456
      %s458 = scalar_lea.vmem %s10, %s457
      %v459 = vld [vmem:[%s429] sm:$0xf]
      %v460 = vld [vmem:[%s437] sm:$0xf]
      %v461 = vld [vmem:[%s2] sm:$0xff]
      %v462 = vld [vmem:[%s3] sm:$0xff]
      %464 = vset.pattern.permute.xlu0 0
      %465 = vperm.xlu0 %464, %v462
      %v466 = vpop.permute.xlu0 %465
      %vm468 = vcmask 31744
      %v470 = vsel %vm468, %v461, 0
      %vm472 = vcmask 1043456
      %v474 = vsel %vm472, %v459, 0
      %476 = vmatpush.msra.mxu0 0.0
      %477 = vmatpush.msra.mxu0 0.0
      %478 = vmatpush.msra.mxu0 0.0
      %479 = vmatpush.msra.mxu0 0.0
      %480 = vmatpush.msra.mxu0 0.0
      %481 = vmatpush.msra.mxu0 0.0
      %482 = vmatpush.msra.mxu0 0.0
      %483 = vmatpush.msra.mxu0 0.0
      %484 = vmatpush.msra.mxu0 0.0
      %485 = vmatpush.msra.mxu0 0.0
      %486 = vmatpush.msra.mxu0 0.0
      %487 = vmatpush.msra.mxu0 0.0
      %488 = vmatpush.msra.mxu0 0.0
      %489 = vmatpush.msra.mxu0 0.0
      %490 = vmatpush.msra.mxu0 0.0
      %491 = vmatpush.msra.mxu0 %v474
      %492 = vmatmul.f32.gmra.mxu0 %v470
      %v493 = vpop.f32.mrf.mxu0
      %v494 = vadd.f32 %v466, %v493
      %495 = vdwg.mxu0
      %v496 = vld [vmem:[%s4] sm:$0xff]
      %v497 = vld [vmem:[%s5] sm:$0xff]
      %499 = vset.pattern.permute.xlu0 0
      %500 = vperm.xlu0 %499, %v497
      %v501 = vpop.permute.xlu0 %500
      %v504 = vsel %vm468, %v496, 0
      %v507 = vsel %vm472, %v460, 0
      %509 = vmatpush.msra.mxu0 0.0
      %510 = vmatpush.msra.mxu0 0.0
      %511 = vmatpush.msra.mxu0 0.0
      %512 = vmatpush.msra.mxu0 0.0
      %513 = vmatpush.msra.mxu0 0.0
      %514 = vmatpush.msra.mxu0 0.0
      %515 = vmatpush.msra.mxu0 0.0
      %516 = vmatpush.msra.mxu0 0.0
      %517 = vmatpush.msra.mxu0 0.0
      %518 = vmatpush.msra.mxu0 0.0
      %519 = vmatpush.msra.mxu0 0.0
      %520 = vmatpush.msra.mxu0 0.0
      %521 = vmatpush.msra.mxu0 0.0
      %522 = vmatpush.msra.mxu0 0.0
      %523 = vmatpush.msra.mxu0 0.0
      %524 = vmatpush.msra.mxu0 %v507
      %525 = vmatmul.f32.gmra.mxu0 %v504
      %v526 = vpop.f32.mrf.mxu0
      %v527 = vadd.f32 %v501, %v526
      %528 = vdwg.mxu0
      %v529 = vadd.f32 %v494, %v527
      %v530 = vmax.f32 %v529, 0.0
      %v531 = vld [vmem:[%s6] sm:$0xff]
      %vm532 = vcmask 64512
      %v534 = vsel %vm532, %v531, 0
      %536 = vmatpush.msra.mxu0 0.0
      %537 = vmatpush.msra.mxu0 0.0
      %538 = vmatpush.msra.mxu0 0.0
      %539 = vmatpush.msra.mxu0 0.0
      %540 = vmatpush.msra.mxu0 0.0
      %541 = vmatpush.msra.mxu0 0.0
      %542 = vmatpush.msra.mxu0 0.0
      %543 = vmatpush.msra.mxu0 0.0
      %544 = vmatpush.msra.mxu0 0.0
      %545 = vmatpush.msra.mxu0 0.0
      %546 = vmatpush.msra.mxu0 0.0
      %547 = vmatpush.msra.mxu0 0.0
      %548 = vmatpush.msra.mxu0 0.0
      %549 = vmatpush.msra.mxu0 0.0
      %550 = vmatpush.msra.mxu0 0.0
      %551 = vmatpush.msra.mxu0 %v530
      %552 = vmatmul.f32.gmra.mxu0 %v534
      %v553 = vpop.f32.mrf.mxu0
      %v554 = vadd.f32 0.0, %v553
      %555 = vdwg.mxu0
      %v556 = vld [vmem:[#allocation2] sm:$0x1]
      %558 = vset.pattern.permute.xlu0 0
      %559 = vperm.xlu0 %558, %v556
      %v560 = vpop.permute.xlu0 %559
      %v562 = vperm.slane %v560, 0
      %v563 = vadd.f32 %v554, %v562
      %564 = vst [vmem:[%s444] sm:$0x1] %v563
      %vm565 = vcmask 1040384
      %v566 = vsel %vm565, %v563, 0.0
      %567 = vadd.xlane.f32.xlu0 %v566
      %v568 = vpop.xlane.xlu0 %567
      %vm569 = vcmask 0
      %570 = vst.msk [vmem:[%s451] sm:$0x1] %vm569, %v568
      %v571 = vmul.f32 %v563, %v563
      %v572 = vsel %vm565, %v571, 0.0
      %573 = vadd.xlane.f32.xlu0 %v572
      %v574 = vpop.xlane.xlu0 %573
      %575 = vst.msk [vmem:[%s458] sm:$0x1] %vm569, %v574
      %p576 = scmp.lt.s32.totalorder %s28, 1
      %s577 = scalar_select %p576, %s28, 1
      %p578 = scmp.lt.s32.totalorder %s29, 1
      %s579 = scalar_select %p578, %s29, 1
      %s580 = smul.addr %s577, 2
      %s581 = sadd.s32 %s579, %s580
      %s582 = scalar_lea.vmem %s8, %s581
      %p583 = scmp.lt.s32.totalorder %s28, 1
      %s584 = scalar_select %p583, %s28, 1
      %p585 = scmp.lt.s32.totalorder %s29, 1
      %s586 = scalar_select %p585, %s29, 1
      %s587 = smul.addr %s584, 2
      %s588 = sadd.s32 %s586, %s587
      %s589 = scalar_lea.vmem %s9, %s588
      %p590 = scmp.lt.s32.totalorder %s28, 1
      %s591 = scalar_select %p590, %s28, 1
      %p592 = scmp.lt.s32.totalorder %s29, 1
      %s593 = scalar_select %p592, %s29, 1
      %s594 = smul.addr %s591, 2
      %s595 = sadd.s32 %s593, %s594
      %s596 = scalar_lea.vmem %s10, %s595
      // Predicated region
      $region53: #{attention_block_forward.4} parent=51 // pred_check
        %p597 = pneg %p238
      $region54: #{attention_block_forward.4} parent=51 // pred_check_branch
        %599 = sbr.rel (%p597) target = $region56
      $region55: #{attention_block_forward.4} parent=51 // pred_region
        _
      $region56: #{attention_block_forward.4} parent=51 // pred_fallthru
        _
      // Predicated region
      $region57: #{attention_block_forward.4} parent=51 // pred_check
        %p600 = pneg %p266
      $region58: #{attention_block_forward.4} parent=51 // pred_check_branch
        %602 = sbr.rel (%p600) target = $region60
      $region59: #{attention_block_forward.4} parent=51 // pred_region
        _
      $region60: #{attention_block_forward.4} parent=51 // pred_fallthru
        _
      // Predicated region
      $region61: #{attention_block_forward.4} parent=51 // pred_check
        %p603 = pneg %p294
      $region62: #{attention_block_forward.4} parent=51 // pred_check_branch
        %605 = sbr.rel (%p603) target = $region64
      $region63: #{attention_block_forward.4} parent=51 // pred_region
        _
      $region64: #{attention_block_forward.4} parent=51 // pred_fallthru
        _
    $region52: #{attention_block_forward.4} parent=5 // pred_fallthru
      _
    %p606 = scmp.le.s32.totalorder 2, %s19
    // Predicated region
    $region65: #{attention_block_forward.4} parent=5 // pred_check
      %p607 = pneg %p606
    $region66: #{attention_block_forward.4} parent=5 // pred_check_branch
      %609 = sbr.rel (%p607) target = $region68
    $region67: #{attention_block_forward.4} parent=5 // pred_region
      %s610 = ssub.s32 %s19, 2
      // Predicated region
      $region69: #{attention_block_forward.4} parent=67 // pred_check
        %p611 = pneg %p244
      $region70: #{attention_block_forward.4} parent=67 // pred_check_branch
        %613 = sbr.rel (%p611) target = $region72
      $region71: #{attention_block_forward.4} parent=67 // pred_region
        %p614 = scmp.lt.s32.totalorder %s30, 1
        %s615 = scalar_select %p614, %s30, 1
        %p616 = scmp.lt.s32.totalorder %s31, 1
        %s617 = scalar_select %p616, %s31, 1
        %s618 = smul.addr %s615, 2
        %s619 = sadd.s32 %s617, %s618
        %s620 = scalar_lea.vmem %s8, %s619
      $region72: #{attention_block_forward.4} parent=67 // pred_fallthru
        _
      // Predicated region
      $region73: #{attention_block_forward.4} parent=67 // pred_check
        %p621 = pneg %p272
      $region74: #{attention_block_forward.4} parent=67 // pred_check_branch
        %623 = sbr.rel (%p621) target = $region76
      $region75: #{attention_block_forward.4} parent=67 // pred_region
        %p624 = scmp.lt.s32.totalorder %s30, 1
        %s625 = scalar_select %p624, %s30, 1
        %p626 = scmp.lt.s32.totalorder %s31, 1
        %s627 = scalar_select %p626, %s31, 1
        %s628 = smul.addr %s625, 2
        %s629 = sadd.s32 %s627, %s628
        %s630 = scalar_lea.vmem %s9, %s629
      $region76: #{attention_block_forward.4} parent=67 // pred_fallthru
        _
      // Predicated region
      $region77: #{attention_block_forward.4} parent=67 // pred_check
        %p631 = pneg %p300
      $region78: #{attention_block_forward.4} parent=67 // pred_check_branch
        %633 = sbr.rel (%p631) target = $region80
      $region79: #{attention_block_forward.4} parent=67 // pred_region
        %p634 = scmp.lt.s32.totalorder %s30, 1
        %s635 = scalar_select %p634, %s30, 1
        %p636 = scmp.lt.s32.totalorder %s31, 1
        %s637 = scalar_select %p636, %s31, 1
        %s638 = smul.addr %s635, 2
        %s639 = sadd.s32 %s637, %s638
        %s640 = scalar_lea.vmem %s10, %s639
      $region80: #{attention_block_forward.4} parent=67 // pred_fallthru
        _
    $region68: #{attention_block_forward.4} parent=5 // pred_fallthru
      _
  $region6: #{attention_block_forward.4} parent=0 // loop_footer
    %s23 = sadd.s32 1, %s19
  $region7: #{attention_block_forward.4} parent=0 // loop_footer_branch
    %18 = sbr.rel target = $region3
  $region8: #{attention_block_forward.4} parent=0 // loop_exit
    _

</llo_original>
